<compile_context>
chip_gen: v7x
topology: tpu7x:2x2x1
jax: 0.10.0
libtpu: 0.0.40
codegen_flags: <defaults>
</compile_context>

<pallas_src>
import math

import jax
import jax.numpy as jnp
from jax.experimental import pallas as pl
from jax.experimental.pallas import tpu as pltpu


def _round_up(x, m):
    return ((x + m - 1) // m) * m


def _make_embed_gather_kernel(*, scale, tl, batch, add_pe,
                              issue_unroll, wait_unroll):
    """Row-gather kernel with cross-tile double-buffered DMA.

    Grid is (n_outer, n_inner):
      axis 0 ("parallel")  - independent position chunks, may be split across
                             TensorCores; no state crosses it.
      axis 1 ("arbitrary") - sequential per core; tile j+1's gathers are
                             issued while tile j completes (double buffering).
    """
    rows = tl * batch
    assert tl % issue_unroll == 0 and rows % wait_unroll == 0

    def kernel(ids_ref, tbl_hbm, *rest):
        # ids_ref : SMEM (n_tiles*rows,) int32  flattened token ids (prefetch)
        # tbl_hbm : HBM  (V, Dp) f32            embedding table (pl.ANY)
        # pe_ref  : VMEM (tl, 1, Dp) f32        positional rows (if add_pe)
        # out_ref : VMEM (tl, batch, Dp) f32
        # gbuf    : VMEM (2, tl, batch, Dp) f32 gather double-buffer
        # sem     : DMA semaphores (2,)         one shared sem per slot
        if add_pe:
            pe_ref, out_ref, gbuf, sem = rest
        else:
            out_ref, gbuf, sem = rest

        c = pl.program_id(0)
        j = pl.program_id(1)
        n_inner = pl.num_programs(1)
        slot = j % 2
        tile = c * n_inner + j

        def issue(tile_idx, s):
            # One DMA per token: HBM table row -> gather buffer slot `s`.
            # All copies of a slot signal the shared semaphore sem[s].
            base = tile_idx * rows

            @pl.loop(0, tl // issue_unroll)
            def _issue(it):
                for u in range(issue_unroll):        # manual unroll
                    p = it * issue_unroll + u
                    for b in range(batch):           # static batch unroll
                        tok = ids_ref[base + p * batch + b]
                        pltpu.make_async_copy(
                            tbl_hbm.at[pl.ds(tok, 1), :],
                            gbuf.at[s, p, pl.ds(b, 1), :],
                            sem.at[s],
                        ).start()

        # Prime the pipeline on this core's first sequential step.
        @pl.when(j == 0)
        def _():
            issue(tile, slot)                        # slot == 0 here

        # Look-ahead: issue the next tile's gathers into the other slot so
        # they complete while this tile is waited on / computed / stored.
        @pl.when(j + 1 < n_inner)
        def _():
            issue(tile + 1, 1 - slot)

        # Wait for this tile's `rows` row copies.  Every copy has the same
        # (1, Dp) shape, so each wait on the shared per-slot semaphore
        # consumes exactly one completed row copy.
        @pl.loop(0, rows // wait_unroll)
        def _wait(_it):
            for _u in range(wait_unroll):
                pltpu.make_async_copy(
                    tbl_hbm.at[pl.ds(0, 1), :],
                    gbuf.at[slot, 0, pl.ds(0, 1), :],
                    sem.at[slot],
                ).wait()

        emb = gbuf[slot]                             # (tl, batch, Dp) f32
        if add_pe:
            # PositionalEncoding: emb * sqrt(dim) + pe, PE broadcast over
            # batch in-register (no pre-broadcast PE in HBM).
            emb = emb * scale + pe_ref[...]          # (tl,1,Dp) broadcasts
        # nn.Dropout(p=0) is identity; nothing to emit.
        out_ref[...] = emb.astype(out_ref.dtype)

    return kernel


def _embed_lookup(source, table, pe_rows, *, scale, positions_per_tile,
                  target_rows_per_tile):
    """One pallas_call over a (L, B) chunk. pe_rows is (L, D) or None."""
    L, B = source.shape
    V, D = table.shape
    add_pe = pe_rows is not None

    # Lane-dense layout: pad embedding dim to a multiple of 128.
    Dp = _round_up(D, 128)

    # Tile size in positions; rows per tile = tl * B.
    if positions_per_tile is None:
        tl = _round_up(max(1, target_rows_per_tile // B), 8)
    else:
        tl = _round_up(max(1, positions_per_tile), 8)
    tl = min(tl, _round_up(L, 8))

    l_tiles = -(-L // tl)
    n_outer = 2 if l_tiles >= 2 else 1    # feeds both v7x TensorCores
    n_inner = -(-l_tiles // n_outer)
    n_tiles = n_outer * n_inner
    L_pad = n_tiles * tl
    rows = tl * B

    # Flatten + pad ids; clamp out-of-range ids so the gather DMA cannot
    # fault (PyTorch nn.Embedding would raise on such ids).
    src = jnp.pad(source.astype(jnp.int32), ((0, L_pad - L), (0, 0)))
    ids = jnp.clip(src.reshape(-1), 0, V - 1)

    tbl = table.astype(jnp.float32)
    if Dp != D:
        tbl = jnp.pad(tbl, ((0, 0), (0, Dp - D)))

    in_specs = [pl.BlockSpec(memory_space=pl.ANY)]   # table stays in HBM
    operands = [tbl]

    if add_pe:
        pe_p = jnp.pad(pe_rows.astype(jnp.float32),
                       ((0, L_pad - L), (0, Dp - D)))
        pe_p = pe_p[:, None, :]                      # (L_pad, 1, Dp)
        in_specs.append(
            pl.BlockSpec((tl, 1, Dp),
                         lambda c, j, ids_ref: (c * n_inner + j, 0, 0)))
        operands.append(pe_p)

    kernel = _make_embed_gather_kernel(
        scale=scale, tl=tl, batch=B, add_pe=add_pe,
        issue_unroll=4, wait_unroll=8)

    out = pl.pallas_call(
        kernel,
        out_shape=jax.ShapeDtypeStruct((L_pad, B, Dp), jnp.float32),
        grid_spec=pltpu.PrefetchScalarGridSpec(
            num_scalar_prefetch=1,                   # ids -> SMEM
            grid=(n_outer, n_inner),
            in_specs=in_specs,
            out_specs=pl.BlockSpec(
                (tl, B, Dp),
                lambda c, j, ids_ref: (c * n_inner + j, 0, 0)),
            scratch_shapes=[
                pltpu.VMEM((2, tl, B, Dp), jnp.float32),  # gather dbl-buffer
                pltpu.SemaphoreType.DMA((2,)),            # one sem per slot
            ]),
        compiler_params=pltpu.CompilerParams(
            dimension_semantics=("parallel", "arbitrary"),
            # Explicit, modest limit: above v5e's 16 MiB scoped default and
            # half of v7x's 64 MiB physical VMEM; our footprint is far less.
            vmem_limit_bytes=32 * 1024 * 1024),
    )(ids, *operands)

    return out[:L, :, :D]


def embeddings_forward(source, table, pe=None, *, position_encoding=True,
                       step=None, is_encoder=False, positions_per_tile=None,
                       target_rows_per_tile=512, max_ids_per_call=1 << 16):
    """Forward of opennmt Embeddings (dropout=0).

    source: (L, B) int token ids; table: (V, D) f32; pe: (max_len, D) f32.
    Returns (L, B, D) f32, matching Embeddings.forward.
    """
    L, B = source.shape
    V, D = table.shape
    add_pe = bool(position_encoding)
    scale = math.sqrt(D) if add_pe else 1.0

    pe_rows = None
    if add_pe:
        assert pe is not None, "pe table required when position_encoding=True"
        pe_f = pe.astype(jnp.float32)
        if step is None:
            pe_rows = pe_f[:L]
        else:
            pe_rows = jnp.broadcast_to(pe_f[step][None, :], (L, D))
            if is_encoder:
                pe_rows = pe_rows + pe_f[:L]

    # Bound the scalar-prefetched id list (SMEM budget): chunk long sequences.
    max_pos = max(8, max_ids_per_call // B)
    if L > max_pos:
        outs = []
        for off in range(0, L, max_pos):
            sl = slice(off, min(off + max_pos, L))
            outs.append(_embed_lookup(
                source[sl], table,
                None if pe_rows is None else pe_rows[sl],
                scale=scale, positions_per_tile=positions_per_tile,
                target_rows_per_tile=target_rows_per_tile))
        return jnp.concatenate(outs, axis=0)

    return _embed_lookup(source, table, pe_rows, scale=scale,
                         positions_per_tile=positions_per_tile,
                         target_rows_per_tile=target_rows_per_tile)


def make_positional_encoding(max_len, dim):
    position = jnp.arange(max_len, dtype=jnp.float32)[:, None]          # (L,1)
    div_term = jnp.exp(jnp.arange(0, dim, 2, dtype=jnp.float32)
                       * -(math.log(10000.0) / dim))                    # (D/2,)
    sin = jnp.sin(position * div_term)
    cos = jnp.cos(position * div_term)
    # interleave -> pe[:, 0::2] = sin, pe[:, 1::2] = cos
    pe = jnp.stack([sin, cos], axis=-1).reshape(max_len, dim)
    return pe


if __name__ == "__main__":
    key = jax.random.PRNGKey(0)
    k_tbl, k_src = jax.random.split(key)

    # Small shapes consistent with the module: source [len x batch].
    L, B = 32, 4
    V, D = 512, 128          # D multiple of 128 -> lane-dense, no D padding
    padding_idx = 1

    # nn.Embedding weight ~ N(0,1), padding row zeroed.
    table = jax.random.normal(k_tbl, (V, D), dtype=jnp.float32)
    table = table.at[padding_idx].set(0.0)

    pe = make_positional_encoding(max_len=64, dim=D)

    source = jax.random.randint(k_src, (L, B), 0, V, dtype=jnp.int32)
    source = source.at[0, 0].set(padding_idx).at[3, 2].set(padding_idx)

    # Encoder path: gather + sqrt(D) scale + fused PE add.  positions_per_tile=8
    # -> 4 tiles -> grid (2, 2): exercises the 2-way core split, the prime,
    # the cross-tile double-buffered gather and the slot handoff at the seam.
    out = embeddings_forward(source, table, pe, position_encoding=True,
                             positions_per_tile=8)
    out = jax.block_until_ready(out)
    ref = table[source] * math.sqrt(D) + pe[:L][:, None, :]
    assert out.shape == (L, B, D)
    assert jnp.allclose(out, ref, atol=1e-5, rtol=1e-5)

    # Pure lookup path (position_encoding=False): no scale, no PE operand.
    out2 = embeddings_forward(source, table, position_encoding=False,
                              positions_per_tile=8)
    out2 = jax.block_until_ready(out2)
    assert jnp.allclose(out2, table[source], atol=1e-6, rtol=1e-6)

    # Decoder single-step path (step=4): single tile, no look-ahead branch.
    src_step = source[:1]
    out3 = embeddings_forward(src_step, table, pe, position_encoding=True,
                              step=4)
    out3 = jax.block_until_ready(out3)
    ref3 = table[src_step] * math.sqrt(D) + pe[4][None, None, :]
    assert jnp.allclose(out3, ref3, atol=1e-5, rtol=1e-5)

    print("KERNEL_OK")
</pallas_src>

<mosaic_0001>
module attributes {stable_mosaic.version = 11 : i64} {
  func.func @kernel(%arg0: i32, %arg1: i32, %arg2: memref<128xi32, #tpu.memory_space<smem>>, %arg3: memref<512x128xf32, #tpu.memory_space<any>>, %arg4: memref<8x1x128xf32, #tpu.memory_space<vmem>>, %arg5: memref<8x4x128xf32, #tpu.memory_space<vmem>>, %arg6: memref<2x8x4x128xf32, #tpu.memory_space<vmem>>, %arg7: memref<2x!tpu.dma_semaphore, #tpu.memory_space<semaphore_mem>>) attributes {dimension_semantics = [#tpu.dimension_semantics<parallel>, #tpu.dimension_semantics<arbitrary>], iteration_bounds = array<i64: 2, 2>, scalar_prefetch = 1 : i64, scratch_operands = 2 : i64, tpu.core_type = #tpu.core_type<tc>, window_params = [{}, {transform_indices = @transform_1, window_bounds = array<i64: 8, 1, 128>}, {transform_indices = @transform_2, window_bounds = array<i64: 8, 4, 128>}]} {
    %c2_i32 = arith.constant 2 : i32
    %c0_i32 = arith.constant 0 : i32
    %0 = arith.cmpi eq, %c2_i32, %c0_i32 : i32
    %c1_i32 = arith.constant 1 : i32
    %1 = arith.select %0, %c1_i32, %c2_i32 : i32
    %2 = arith.remsi %arg1, %1 : i32
    %c0_i32_0 = arith.constant 0 : i32
    %3 = arith.cmpi ne, %2, %c0_i32_0 : i32
    %c0_i32_1 = arith.constant 0 : i32
    %4 = arith.cmpi slt, %2, %c0_i32_1 : i32
    %c0_i32_2 = arith.constant 0 : i32
    %5 = arith.cmpi slt, %1, %c0_i32_2 : i32
    %6 = arith.xori %4, %5 : i1
    %7 = arith.andi %6, %3 : i1
    %8 = arith.addi %2, %1 : i32
    %9 = arith.select %7, %8, %2 : i32
    %c2_i32_3 = arith.constant 2 : i32
    %10 = arith.muli %arg0, %c2_i32_3 : i32
    %11 = arith.addi %10, %arg1 : i32
    %c0_i32_4 = arith.constant 0 : i32
    %12 = arith.cmpi eq, %arg1, %c0_i32_4 : i32
    %13 = arith.extui %12 : i1 to i32
    %c0_i32_5 = arith.constant 0 : i32
    %14 = arith.cmpi ne, %13, %c0_i32_5 : i32
    scf.if %14 {
      %c32_i32 = arith.constant 32 : i32
      %29 = arith.muli %11, %c32_i32 : i32
      %c0_i32_19 = arith.constant 0 : i32
      %c2_i32_20 = arith.constant 2 : i32
      %30 = arith.addi %c0_i32_19, %c2_i32_20 : i32
      %c1_i32_21 = arith.constant 1 : i32
      scf.for %arg8 = %c0_i32_19 to %30 step %c1_i32_21  : i32 {
        %c1_i32_23 = arith.constant 1 : i32
        %31 = arith.muli %arg8, %c1_i32_23 : i32
        %c0_i32_24 = arith.constant 0 : i32
        %32 = arith.addi %c0_i32_24, %31 : i32
        %c4_i32_25 = arith.constant 4 : i32
        %33 = arith.muli %32, %c4_i32_25 : i32
        %c0_i32_26 = arith.constant 0 : i32
        %34 = arith.addi %33, %c0_i32_26 : i32
        %c4_i32_27 = arith.constant 4 : i32
        %35 = arith.muli %34, %c4_i32_27 : i32
        %36 = arith.addi %29, %35 : i32
        %c0_i32_28 = arith.constant 0 : i32
        %37 = arith.addi %36, %c0_i32_28 : i32
        %38 = arith.index_cast %37 : i32 to index
        %39 = memref.load %arg2[%38] : memref<128xi32, #tpu.memory_space<smem>>
        %c0_i32_29 = arith.constant 0 : i32
        %40 = tpu.memref_slice %arg3[%39, %c0_i32_29] : memref<512x128xf32, #tpu.memory_space<any>> -> memref<1x128xf32, #tpu.memory_space<any>>
        %c0_i32_30 = arith.constant 0 : i32
        %c0_i32_31 = arith.constant 0 : i32
        %41 = tpu.memref_slice %arg6[%9, %34, %c0_i32_30, %c0_i32_31] : memref<2x8x4x128xf32, #tpu.memory_space<vmem>> -> memref<1x1x1x128xf32, #tpu.memory_space<vmem>>
        %42 = tpu.memref_squeeze %41 : memref<1x1x1x128xf32, #tpu.memory_space<vmem>> -> memref<1x128xf32, #tpu.memory_space<vmem>>
        %43 = tpu.memref_slice %arg7[%9] : memref<2x!tpu.dma_semaphore, #tpu.memory_space<semaphore_mem>> -> memref<1x!tpu.dma_semaphore, #tpu.memory_space<semaphore_mem>>
        %44 = tpu.memref_squeeze %43 : memref<1x!tpu.dma_semaphore, #tpu.memory_space<semaphore_mem>> -> memref<!tpu.dma_semaphore, #tpu.memory_space<semaphore_mem>>
        tpu.enqueue_dma source(%40 : memref<1x128xf32, #tpu.memory_space<any>>) target(%42 : memref<1x128xf32, #tpu.memory_space<vmem>>) target_semaphore(%44 : memref<!tpu.dma_semaphore, #tpu.memory_space<semaphore_mem>>)
        %c4_i32_32 = arith.constant 4 : i32
        %45 = arith.muli %34, %c4_i32_32 : i32
        %46 = arith.addi %29, %45 : i32
        %c1_i32_33 = arith.constant 1 : i32
        %47 = arith.addi %46, %c1_i32_33 : i32
        %48 = arith.index_cast %47 : i32 to index
        %49 = memref.load %arg2[%48] : memref<128xi32, #tpu.memory_space<smem>>
        %c0_i32_34 = arith.constant 0 : i32
        %50 = tpu.memref_slice %arg3[%49, %c0_i32_34] : memref<512x128xf32, #tpu.memory_space<any>> -> memref<1x128xf32, #tpu.memory_space<any>>
        %c1_i32_35 = arith.constant 1 : i32
        %c0_i32_36 = arith.constant 0 : i32
        %51 = tpu.memref_slice %arg6[%9, %34, %c1_i32_35, %c0_i32_36] : memref<2x8x4x128xf32, #tpu.memory_space<vmem>> -> memref<1x1x1x128xf32, #tpu.memory_space<vmem>>
        %52 = tpu.memref_squeeze %51 : memref<1x1x1x128xf32, #tpu.memory_space<vmem>> -> memref<1x128xf32, #tpu.memory_space<vmem>>
        %53 = tpu.memref_slice %arg7[%9] : memref<2x!tpu.dma_semaphore, #tpu.memory_space<semaphore_mem>> -> memref<1x!tpu.dma_semaphore, #tpu.memory_space<semaphore_mem>>
        %54 = tpu.memref_squeeze %53 : memref<1x!tpu.dma_semaphore, #tpu.memory_space<semaphore_mem>> -> memref<!tpu.dma_semaphore, #tpu.memory_space<semaphore_mem>>
        tpu.enqueue_dma source(%50 : memref<1x128xf32, #tpu.memory_space<any>>) target(%52 : memref<1x128xf32, #tpu.memory_space<vmem>>) target_semaphore(%54 : memref<!tpu.dma_semaphore, #tpu.memory_space<semaphore_mem>>)
        %c4_i32_37 = arith.constant 4 : i32
        %55 = arith.muli %34, %c4_i32_37 : i32
        %56 = arith.addi %29, %55 : i32
        %c2_i32_38 = arith.constant 2 : i32
        %57 = arith.addi %56, %c2_i32_38 : i32
        %58 = arith.index_cast %57 : i32 to index
        %59 = memref.load %arg2[%58] : memref<128xi32, #tpu.memory_space<smem>>
        %c0_i32_39 = arith.constant 0 : i32
        %60 = tpu.memref_slice %arg3[%59, %c0_i32_39] : memref<512x128xf32, #tpu.memory_space<any>> -> memref<1x128xf32, #tpu.memory_space<any>>
        %c2_i32_40 = arith.constant 2 : i32
        %c0_i32_41 = arith.constant 0 : i32
        %61 = tpu.memref_slice %arg6[%9, %34, %c2_i32_40, %c0_i32_41] : memref<2x8x4x128xf32, #tpu.memory_space<vmem>> -> memref<1x1x1x128xf32, #tpu.memory_space<vmem>>
        %62 = tpu.memref_squeeze %61 : memref<1x1x1x128xf32, #tpu.memory_space<vmem>> -> memref<1x128xf32, #tpu.memory_space<vmem>>
        %63 = tpu.memref_slice %arg7[%9] : memref<2x!tpu.dma_semaphore, #tpu.memory_space<semaphore_mem>> -> memref<1x!tpu.dma_semaphore, #tpu.memory_space<semaphore_mem>>
        %64 = tpu.memref_squeeze %63 : memref<1x!tpu.dma_semaphore, #tpu.memory_space<semaphore_mem>> -> memref<!tpu.dma_semaphore, #tpu.memory_space<semaphore_mem>>
        tpu.enqueue_dma source(%60 : memref<1x128xf32, #tpu.memory_space<any>>) target(%62 : memref<1x128xf32, #tpu.memory_space<vmem>>) target_semaphore(%64 : memref<!tpu.dma_semaphore, #tpu.memory_space<semaphore_mem>>)
        %c4_i32_42 = arith.constant 4 : i32
        %65 = arith.muli %34, %c4_i32_42 : i32
        %66 = arith.addi %29, %65 : i32
        %c3_i32 = arith.constant 3 : i32
        %67 = arith.addi %66, %c3_i32 : i32
        %68 = arith.index_cast %67 : i32 to index
        %69 = memref.load %arg2[%68] : memref<128xi32, #tpu.memory_space<smem>>
        %c0_i32_43 = arith.constant 0 : i32
        %70 = tpu.memref_slice %arg3[%69, %c0_i32_43] : memref<512x128xf32, #tpu.memory_space<any>> -> memref<1x128xf32, #tpu.memory_space<any>>
        %c3_i32_44 = arith.constant 3 : i32
        %c0_i32_45 = arith.constant 0 : i32
        %71 = tpu.memref_slice %arg6[%9, %34, %c3_i32_44, %c0_i32_45] : memref<2x8x4x128xf32, #tpu.memory_space<vmem>> -> memref<1x1x1x128xf32, #tpu.memory_space<vmem>>
        %72 = tpu.memref_squeeze %71 : memref<1x1x1x128xf32, #tpu.memory_space<vmem>> -> memref<1x128xf32, #tpu.memory_space<vmem>>
        %73 = tpu.memref_slice %arg7[%9] : memref<2x!tpu.dma_semaphore, #tpu.memory_space<semaphore_mem>> -> memref<1x!tpu.dma_semaphore, #tpu.memory_space<semaphore_mem>>
        %74 = tpu.memref_squeeze %73 : memref<1x!tpu.dma_semaphore, #tpu.memory_space<semaphore_mem>> -> memref<!tpu.dma_semaphore, #tpu.memory_space<semaphore_mem>>
        tpu.enqueue_dma source(%70 : memref<1x128xf32, #tpu.memory_space<any>>) target(%72 : memref<1x128xf32, #tpu.memory_space<vmem>>) target_semaphore(%74 : memref<!tpu.dma_semaphore, #tpu.memory_space<semaphore_mem>>)
        %c4_i32_46 = arith.constant 4 : i32
        %75 = arith.muli %32, %c4_i32_46 : i32
        %c1_i32_47 = arith.constant 1 : i32
        %76 = arith.addi %75, %c1_i32_47 : i32
        %c4_i32_48 = arith.constant 4 : i32
        %77 = arith.muli %76, %c4_i32_48 : i32
        %78 = arith.addi %29, %77 : i32
        %c0_i32_49 = arith.constant 0 : i32
        %79 = arith.addi %78, %c0_i32_49 : i32
        %80 = arith.index_cast %79 : i32 to index
        %81 = memref.load %arg2[%80] : memref<128xi32, #tpu.memory_space<smem>>
        %c0_i32_50 = arith.constant 0 : i32
        %82 = tpu.memref_slice %arg3[%81, %c0_i32_50] : memref<512x128xf32, #tpu.memory_space<any>> -> memref<1x128xf32, #tpu.memory_space<any>>
        %c0_i32_51 = arith.constant 0 : i32
        %c0_i32_52 = arith.constant 0 : i32
        %83 = tpu.memref_slice %arg6[%9, %76, %c0_i32_51, %c0_i32_52] : memref<2x8x4x128xf32, #tpu.memory_space<vmem>> -> memref<1x1x1x128xf32, #tpu.memory_space<vmem>>
        %84 = tpu.memref_squeeze %83 : memref<1x1x1x128xf32, #tpu.memory_space<vmem>> -> memref<1x128xf32, #tpu.memory_space<vmem>>
        %85 = tpu.memref_slice %arg7[%9] : memref<2x!tpu.dma_semaphore, #tpu.memory_space<semaphore_mem>> -> memref<1x!tpu.dma_semaphore, #tpu.memory_space<semaphore_mem>>
        %86 = tpu.memref_squeeze %85 : memref<1x!tpu.dma_semaphore, #tpu.memory_space<semaphore_mem>> -> memref<!tpu.dma_semaphore, #tpu.memory_space<semaphore_mem>>
        tpu.enqueue_dma source(%82 : memref<1x128xf32, #tpu.memory_space<any>>) target(%84 : memref<1x128xf32, #tpu.memory_space<vmem>>) target_semaphore(%86 : memref<!tpu.dma_semaphore, #tpu.memory_space<semaphore_mem>>)
        %c4_i32_53 = arith.constant 4 : i32
        %87 = arith.muli %76, %c4_i32_53 : i32
        %88 = arith.addi %29, %87 : i32
        %c1_i32_54 = arith.constant 1 : i32
        %89 = arith.addi %88, %c1_i32_54 : i32
        %90 = arith.index_cast %89 : i32 to index
        %91 = memref.load %arg2[%90] : memref<128xi32, #tpu.memory_space<smem>>
        %c0_i32_55 = arith.constant 0 : i32
        %92 = tpu.memref_slice %arg3[%91, %c0_i32_55] : memref<512x128xf32, #tpu.memory_space<any>> -> memref<1x128xf32, #tpu.memory_space<any>>
        %c1_i32_56 = arith.constant 1 : i32
        %c0_i32_57 = arith.constant 0 : i32
        %93 = tpu.memref_slice %arg6[%9, %76, %c1_i32_56, %c0_i32_57] : memref<2x8x4x128xf32, #tpu.memory_space<vmem>> -> memref<1x1x1x128xf32, #tpu.memory_space<vmem>>
        %94 = tpu.memref_squeeze %93 : memref<1x1x1x128xf32, #tpu.memory_space<vmem>> -> memref<1x128xf32, #tpu.memory_space<vmem>>
        %95 = tpu.memref_slice %arg7[%9] : memref<2x!tpu.dma_semaphore, #tpu.memory_space<semaphore_mem>> -> memref<1x!tpu.dma_semaphore, #tpu.memory_space<semaphore_mem>>
        %96 = tpu.memref_squeeze %95 : memref<1x!tpu.dma_semaphore, #tpu.memory_space<semaphore_mem>> -> memref<!tpu.dma_semaphore, #tpu.memory_space<semaphore_mem>>
        tpu.enqueue_dma source(%92 : memref<1x128xf32, #tpu.memory_space<any>>) target(%94 : memref<1x128xf32, #tpu.memory_space<vmem>>) target_semaphore(%96 : memref<!tpu.dma_semaphore, #tpu.memory_space<semaphore_mem>>)
        %c4_i32_58 = arith.constant 4 : i32
        %97 = arith.muli %76, %c4_i32_58 : i32
        %98 = arith.addi %29, %97 : i32
        %c2_i32_59 = arith.constant 2 : i32
        %99 = arith.addi %98, %c2_i32_59 : i32
        %100 = arith.index_cast %99 : i32 to index
        %101 = memref.load %arg2[%100] : memref<128xi32, #tpu.memory_space<smem>>
        %c0_i32_60 = arith.constant 0 : i32
        %102 = tpu.memref_slice %arg3[%101, %c0_i32_60] : memref<512x128xf32, #tpu.memory_space<any>> -> memref<1x128xf32, #tpu.memory_space<any>>
        %c2_i32_61 = arith.constant 2 : i32
        %c0_i32_62 = arith.constant 0 : i32
        %103 = tpu.memref_slice %arg6[%9, %76, %c2_i32_61, %c0_i32_62] : memref<2x8x4x128xf32, #tpu.memory_space<vmem>> -> memref<1x1x1x128xf32, #tpu.memory_space<vmem>>
        %104 = tpu.memref_squeeze %103 : memref<1x1x1x128xf32, #tpu.memory_space<vmem>> -> memref<1x128xf32, #tpu.memory_space<vmem>>
        %105 = tpu.memref_slice %arg7[%9] : memref<2x!tpu.dma_semaphore, #tpu.memory_space<semaphore_mem>> -> memref<1x!tpu.dma_semaphore, #tpu.memory_space<semaphore_mem>>
        %106 = tpu.memref_squeeze %105 : memref<1x!tpu.dma_semaphore, #tpu.memory_space<semaphore_mem>> -> memref<!tpu.dma_semaphore, #tpu.memory_space<semaphore_mem>>
        tpu.enqueue_dma source(%102 : memref<1x128xf32, #tpu.memory_space<any>>) target(%104 : memref<1x128xf32, #tpu.memory_space<vmem>>) target_semaphore(%106 : memref<!tpu.dma_semaphore, #tpu.memory_space<semaphore_mem>>)
        %c4_i32_63 = arith.constant 4 : i32
        %107 = arith.muli %76, %c4_i32_63 : i32
        %108 = arith.addi %29, %107 : i32
        %c3_i32_64 = arith.constant 3 : i32
        %109 = arith.addi %108, %c3_i32_64 : i32
        %110 = arith.index_cast %109 : i32 to index
        %111 = memref.load %arg2[%110] : memref<128xi32, #tpu.memory_space<smem>>
        %c0_i32_65 = arith.constant 0 : i32
        %112 = tpu.memref_slice %arg3[%111, %c0_i32_65] : memref<512x128xf32, #tpu.memory_space<any>> -> memref<1x128xf32, #tpu.memory_space<any>>
        %c3_i32_66 = arith.constant 3 : i32
        %c0_i32_67 = arith.constant 0 : i32
        %113 = tpu.memref_slice %arg6[%9, %76, %c3_i32_66, %c0_i32_67] : memref<2x8x4x128xf32, #tpu.memory_space<vmem>> -> memref<1x1x1x128xf32, #tpu.memory_space<vmem>>
        %114 = tpu.memref_squeeze %113 : memref<1x1x1x128xf32, #tpu.memory_space<vmem>> -> memref<1x128xf32, #tpu.memory_space<vmem>>
        %115 = tpu.memref_slice %arg7[%9] : memref<2x!tpu.dma_semaphore, #tpu.memory_space<semaphore_mem>> -> memref<1x!tpu.dma_semaphore, #tpu.memory_space<semaphore_mem>>
        %116 = tpu.memref_squeeze %115 : memref<1x!tpu.dma_semaphore, #tpu.memory_space<semaphore_mem>> -> memref<!tpu.dma_semaphore, #tpu.memory_space<semaphore_mem>>
        tpu.enqueue_dma source(%112 : memref<1x128xf32, #tpu.memory_space<any>>) target(%114 : memref<1x128xf32, #tpu.memory_space<vmem>>) target_semaphore(%116 : memref<!tpu.dma_semaphore, #tpu.memory_space<semaphore_mem>>)
        %c4_i32_68 = arith.constant 4 : i32
        %117 = arith.muli %32, %c4_i32_68 : i32
        %c2_i32_69 = arith.constant 2 : i32
        %118 = arith.addi %117, %c2_i32_69 : i32
        %c4_i32_70 = arith.constant 4 : i32
        %119 = arith.muli %118, %c4_i32_70 : i32
        %120 = arith.addi %29, %119 : i32
        %c0_i32_71 = arith.constant 0 : i32
        %121 = arith.addi %120, %c0_i32_71 : i32
        %122 = arith.index_cast %121 : i32 to index
        %123 = memref.load %arg2[%122] : memref<128xi32, #tpu.memory_space<smem>>
        %c0_i32_72 = arith.constant 0 : i32
        %124 = tpu.memref_slice %arg3[%123, %c0_i32_72] : memref<512x128xf32, #tpu.memory_space<any>> -> memref<1x128xf32, #tpu.memory_space<any>>
        %c0_i32_73 = arith.constant 0 : i32
        %c0_i32_74 = arith.constant 0 : i32
        %125 = tpu.memref_slice %arg6[%9, %118, %c0_i32_73, %c0_i32_74] : memref<2x8x4x128xf32, #tpu.memory_space<vmem>> -> memref<1x1x1x128xf32, #tpu.memory_space<vmem>>
        %126 = tpu.memref_squeeze %125 : memref<1x1x1x128xf32, #tpu.memory_space<vmem>> -> memref<1x128xf32, #tpu.memory_space<vmem>>
        %127 = tpu.memref_slice %arg7[%9] : memref<2x!tpu.dma_semaphore, #tpu.memory_space<semaphore_mem>> -> memref<1x!tpu.dma_semaphore, #tpu.memory_space<semaphore_mem>>
        %128 = tpu.memref_squeeze %127 : memref<1x!tpu.dma_semaphore, #tpu.memory_space<semaphore_mem>> -> memref<!tpu.dma_semaphore, #tpu.memory_space<semaphore_mem>>
        tpu.enqueue_dma source(%124 : memref<1x128xf32, #tpu.memory_space<any>>) target(%126 : memref<1x128xf32, #tpu.memory_space<vmem>>) target_semaphore(%128 : memref<!tpu.dma_semaphore, #tpu.memory_space<semaphore_mem>>)
        %c4_i32_75 = arith.constant 4 : i32
        %129 = arith.muli %118, %c4_i32_75 : i32
        %130 = arith.addi %29, %129 : i32
        %c1_i32_76 = arith.constant 1 : i32
        %131 = arith.addi %130, %c1_i32_76 : i32
        %132 = arith.index_cast %131 : i32 to index
        %133 = memref.load %arg2[%132] : memref<128xi32, #tpu.memory_space<smem>>
        %c0_i32_77 = arith.constant 0 : i32
        %134 = tpu.memref_slice %arg3[%133, %c0_i32_77] : memref<512x128xf32, #tpu.memory_space<any>> -> memref<1x128xf32, #tpu.memory_space<any>>
        %c1_i32_78 = arith.constant 1 : i32
        %c0_i32_79 = arith.constant 0 : i32
        %135 = tpu.memref_slice %arg6[%9, %118, %c1_i32_78, %c0_i32_79] : memref<2x8x4x128xf32, #tpu.memory_space<vmem>> -> memref<1x1x1x128xf32, #tpu.memory_space<vmem>>
        %136 = tpu.memref_squeeze %135 : memref<1x1x1x128xf32, #tpu.memory_space<vmem>> -> memref<1x128xf32, #tpu.memory_space<vmem>>
        %137 = tpu.memref_slice %arg7[%9] : memref<2x!tpu.dma_semaphore, #tpu.memory_space<semaphore_mem>> -> memref<1x!tpu.dma_semaphore, #tpu.memory_space<semaphore_mem>>
        %138 = tpu.memref_squeeze %137 : memref<1x!tpu.dma_semaphore, #tpu.memory_space<semaphore_mem>> -> memref<!tpu.dma_semaphore, #tpu.memory_space<semaphore_mem>>
        tpu.enqueue_dma source(%134 : memref<1x128xf32, #tpu.memory_space<any>>) target(%136 : memref<1x128xf32, #tpu.memory_space<vmem>>) target_semaphore(%138 : memref<!tpu.dma_semaphore, #tpu.memory_space<semaphore_mem>>)
        %c4_i32_80 = arith.constant 4 : i32
        %139 = arith.muli %118, %c4_i32_80 : i32
        %140 = arith.addi %29, %139 : i32
        %c2_i32_81 = arith.constant 2 : i32
        %141 = arith.addi %140, %c2_i32_81 : i32
        %142 = arith.index_cast %141 : i32 to index
        %143 = memref.load %arg2[%142] : memref<128xi32, #tpu.memory_space<smem>>
        %c0_i32_82 = arith.constant 0 : i32
        %144 = tpu.memref_slice %arg3[%143, %c0_i32_82] : memref<512x128xf32, #tpu.memory_space<any>> -> memref<1x128xf32, #tpu.memory_space<any>>
        %c2_i32_83 = arith.constant 2 : i32
        %c0_i32_84 = arith.constant 0 : i32
        %145 = tpu.memref_slice %arg6[%9, %118, %c2_i32_83, %c0_i32_84] : memref<2x8x4x128xf32, #tpu.memory_space<vmem>> -> memref<1x1x1x128xf32, #tpu.memory_space<vmem>>
        %146 = tpu.memref_squeeze %145 : memref<1x1x1x128xf32, #tpu.memory_space<vmem>> -> memref<1x128xf32, #tpu.memory_space<vmem>>
        %147 = tpu.memref_slice %arg7[%9] : memref<2x!tpu.dma_semaphore, #tpu.memory_space<semaphore_mem>> -> memref<1x!tpu.dma_semaphore, #tpu.memory_space<semaphore_mem>>
        %148 = tpu.memref_squeeze %147 : memref<1x!tpu.dma_semaphore, #tpu.memory_space<semaphore_mem>> -> memref<!tpu.dma_semaphore, #tpu.memory_space<semaphore_mem>>
        tpu.enqueue_dma source(%144 : memref<1x128xf32, #tpu.memory_space<any>>) target(%146 : memref<1x128xf32, #tpu.memory_space<vmem>>) target_semaphore(%148 : memref<!tpu.dma_semaphore, #tpu.memory_space<semaphore_mem>>)
        %c4_i32_85 = arith.constant 4 : i32
        %149 = arith.muli %118, %c4_i32_85 : i32
        %150 = arith.addi %29, %149 : i32
        %c3_i32_86 = arith.constant 3 : i32
        %151 = arith.addi %150, %c3_i32_86 : i32
        %152 = arith.index_cast %151 : i32 to index
        %153 = memref.load %arg2[%152] : memref<128xi32, #tpu.memory_space<smem>>
        %c0_i32_87 = arith.constant 0 : i32
        %154 = tpu.memref_slice %arg3[%153, %c0_i32_87] : memref<512x128xf32, #tpu.memory_space<any>> -> memref<1x128xf32, #tpu.memory_space<any>>
        %c3_i32_88 = arith.constant 3 : i32
        %c0_i32_89 = arith.constant 0 : i32
        %155 = tpu.memref_slice %arg6[%9, %118, %c3_i32_88, %c0_i32_89] : memref<2x8x4x128xf32, #tpu.memory_space<vmem>> -> memref<1x1x1x128xf32, #tpu.memory_space<vmem>>
        %156 = tpu.memref_squeeze %155 : memref<1x1x1x128xf32, #tpu.memory_space<vmem>> -> memref<1x128xf32, #tpu.memory_space<vmem>>
        %157 = tpu.memref_slice %arg7[%9] : memref<2x!tpu.dma_semaphore, #tpu.memory_space<semaphore_mem>> -> memref<1x!tpu.dma_semaphore, #tpu.memory_space<semaphore_mem>>
        %158 = tpu.memref_squeeze %157 : memref<1x!tpu.dma_semaphore, #tpu.memory_space<semaphore_mem>> -> memref<!tpu.dma_semaphore, #tpu.memory_space<semaphore_mem>>
        tpu.enqueue_dma source(%154 : memref<1x128xf32, #tpu.memory_space<any>>) target(%156 : memref<1x128xf32, #tpu.memory_space<vmem>>) target_semaphore(%158 : memref<!tpu.dma_semaphore, #tpu.memory_space<semaphore_mem>>)
        %c4_i32_90 = arith.constant 4 : i32
        %159 = arith.muli %32, %c4_i32_90 : i32
        %c3_i32_91 = arith.constant 3 : i32
        %160 = arith.addi %159, %c3_i32_91 : i32
        %c4_i32_92 = arith.constant 4 : i32
        %161 = arith.muli %160, %c4_i32_92 : i32
        %162 = arith.addi %29, %161 : i32
        %c0_i32_93 = arith.constant 0 : i32
        %163 = arith.addi %162, %c0_i32_93 : i32
        %164 = arith.index_cast %163 : i32 to index
        %165 = memref.load %arg2[%164] : memref<128xi32, #tpu.memory_space<smem>>
        %c0_i32_94 = arith.constant 0 : i32
        %166 = tpu.memref_slice %arg3[%165, %c0_i32_94] : memref<512x128xf32, #tpu.memory_space<any>> -> memref<1x128xf32, #tpu.memory_space<any>>
        %c0_i32_95 = arith.constant 0 : i32
        %c0_i32_96 = arith.constant 0 : i32
        %167 = tpu.memref_slice %arg6[%9, %160, %c0_i32_95, %c0_i32_96] : memref<2x8x4x128xf32, #tpu.memory_space<vmem>> -> memref<1x1x1x128xf32, #tpu.memory_space<vmem>>
        %168 = tpu.memref_squeeze %167 : memref<1x1x1x128xf32, #tpu.memory_space<vmem>> -> memref<1x128xf32, #tpu.memory_space<vmem>>
        %169 = tpu.memref_slice %arg7[%9] : memref<2x!tpu.dma_semaphore, #tpu.memory_space<semaphore_mem>> -> memref<1x!tpu.dma_semaphore, #tpu.memory_space<semaphore_mem>>
        %170 = tpu.memref_squeeze %169 : memref<1x!tpu.dma_semaphore, #tpu.memory_space<semaphore_mem>> -> memref<!tpu.dma_semaphore, #tpu.memory_space<semaphore_mem>>
        tpu.enqueue_dma source(%166 : memref<1x128xf32, #tpu.memory_space<any>>) target(%168 : memref<1x128xf32, #tpu.memory_space<vmem>>) target_semaphore(%170 : memref<!tpu.dma_semaphore, #tpu.memory_space<semaphore_mem>>)
        %c4_i32_97 = arith.constant 4 : i32
        %171 = arith.muli %160, %c4_i32_97 : i32
        %172 = arith.addi %29, %171 : i32
        %c1_i32_98 = arith.constant 1 : i32
        %173 = arith.addi %172, %c1_i32_98 : i32
        %174 = arith.index_cast %173 : i32 to index
        %175 = memref.load %arg2[%174] : memref<128xi32, #tpu.memory_space<smem>>
        %c0_i32_99 = arith.constant 0 : i32
        %176 = tpu.memref_slice %arg3[%175, %c0_i32_99] : memref<512x128xf32, #tpu.memory_space<any>> -> memref<1x128xf32, #tpu.memory_space<any>>
        %c1_i32_100 = arith.constant 1 : i32
        %c0_i32_101 = arith.constant 0 : i32
        %177 = tpu.memref_slice %arg6[%9, %160, %c1_i32_100, %c0_i32_101] : memref<2x8x4x128xf32, #tpu.memory_space<vmem>> -> memref<1x1x1x128xf32, #tpu.memory_space<vmem>>
        %178 = tpu.memref_squeeze %177 : memref<1x1x1x128xf32, #tpu.memory_space<vmem>> -> memref<1x128xf32, #tpu.memory_space<vmem>>
        %179 = tpu.memref_slice %arg7[%9] : memref<2x!tpu.dma_semaphore, #tpu.memory_space<semaphore_mem>> -> memref<1x!tpu.dma_semaphore, #tpu.memory_space<semaphore_mem>>
        %180 = tpu.memref_squeeze %179 : memref<1x!tpu.dma_semaphore, #tpu.memory_space<semaphore_mem>> -> memref<!tpu.dma_semaphore, #tpu.memory_space<semaphore_mem>>
        tpu.enqueue_dma source(%176 : memref<1x128xf32, #tpu.memory_space<any>>) target(%178 : memref<1x128xf32, #tpu.memory_space<vmem>>) target_semaphore(%180 : memref<!tpu.dma_semaphore, #tpu.memory_space<semaphore_mem>>)
        %c4_i32_102 = arith.constant 4 : i32
        %181 = arith.muli %160, %c4_i32_102 : i32
        %182 = arith.addi %29, %181 : i32
        %c2_i32_103 = arith.constant 2 : i32
        %183 = arith.addi %182, %c2_i32_103 : i32
        %184 = arith.index_cast %183 : i32 to index
        %185 = memref.load %arg2[%184] : memref<128xi32, #tpu.memory_space<smem>>
        %c0_i32_104 = arith.constant 0 : i32
        %186 = tpu.memref_slice %arg3[%185, %c0_i32_104] : memref<512x128xf32, #tpu.memory_space<any>> -> memref<1x128xf32, #tpu.memory_space<any>>
        %c2_i32_105 = arith.constant 2 : i32
        %c0_i32_106 = arith.constant 0 : i32
        %187 = tpu.memref_slice %arg6[%9, %160, %c2_i32_105, %c0_i32_106] : memref<2x8x4x128xf32, #tpu.memory_space<vmem>> -> memref<1x1x1x128xf32, #tpu.memory_space<vmem>>
        %188 = tpu.memref_squeeze %187 : memref<1x1x1x128xf32, #tpu.memory_space<vmem>> -> memref<1x128xf32, #tpu.memory_space<vmem>>
        %189 = tpu.memref_slice %arg7[%9] : memref<2x!tpu.dma_semaphore, #tpu.memory_space<semaphore_mem>> -> memref<1x!tpu.dma_semaphore, #tpu.memory_space<semaphore_mem>>
        %190 = tpu.memref_squeeze %189 : memref<1x!tpu.dma_semaphore, #tpu.memory_space<semaphore_mem>> -> memref<!tpu.dma_semaphore, #tpu.memory_space<semaphore_mem>>
        tpu.enqueue_dma source(%186 : memref<1x128xf32, #tpu.memory_space<any>>) target(%188 : memref<1x128xf32, #tpu.memory_space<vmem>>) target_semaphore(%190 : memref<!tpu.dma_semaphore, #tpu.memory_space<semaphore_mem>>)
        %c4_i32_107 = arith.constant 4 : i32
        %191 = arith.muli %160, %c4_i32_107 : i32
        %192 = arith.addi %29, %191 : i32
        %c3_i32_108 = arith.constant 3 : i32
        %193 = arith.addi %192, %c3_i32_108 : i32
        %194 = arith.index_cast %193 : i32 to index
        %195 = memref.load %arg2[%194] : memref<128xi32, #tpu.memory_space<smem>>
        %c0_i32_109 = arith.constant 0 : i32
        %196 = tpu.memref_slice %arg3[%195, %c0_i32_109] : memref<512x128xf32, #tpu.memory_space<any>> -> memref<1x128xf32, #tpu.memory_space<any>>
        %c3_i32_110 = arith.constant 3 : i32
        %c0_i32_111 = arith.constant 0 : i32
        %197 = tpu.memref_slice %arg6[%9, %160, %c3_i32_110, %c0_i32_111] : memref<2x8x4x128xf32, #tpu.memory_space<vmem>> -> memref<1x1x1x128xf32, #tpu.memory_space<vmem>>
        %198 = tpu.memref_squeeze %197 : memref<1x1x1x128xf32, #tpu.memory_space<vmem>> -> memref<1x128xf32, #tpu.memory_space<vmem>>
        %199 = tpu.memref_slice %arg7[%9] : memref<2x!tpu.dma_semaphore, #tpu.memory_space<semaphore_mem>> -> memref<1x!tpu.dma_semaphore, #tpu.memory_space<semaphore_mem>>
        %200 = tpu.memref_squeeze %199 : memref<1x!tpu.dma_semaphore, #tpu.memory_space<semaphore_mem>> -> memref<!tpu.dma_semaphore, #tpu.memory_space<semaphore_mem>>
        tpu.enqueue_dma source(%196 : memref<1x128xf32, #tpu.memory_space<any>>) target(%198 : memref<1x128xf32, #tpu.memory_space<vmem>>) target_semaphore(%200 : memref<!tpu.dma_semaphore, #tpu.memory_space<semaphore_mem>>)
      }
      %c2_i32_22 = arith.constant 2 : i32
    } else {
    }
    %c1_i32_6 = arith.constant 1 : i32
    %15 = arith.addi %arg1, %c1_i32_6 : i32
    %c2_i32_7 = arith.constant 2 : i32
    %16 = arith.cmpi slt, %15, %c2_i32_7 : i32
    %17 = arith.extui %16 : i1 to i32
    %c0_i32_8 = arith.constant 0 : i32
    %18 = arith.cmpi ne, %17, %c0_i32_8 : i32
    scf.if %18 {
      %c1_i32_19 = arith.constant 1 : i32
      %29 = arith.addi %11, %c1_i32_19 : i32
      %c1_i32_20 = arith.constant 1 : i32
      %30 = arith.subi %c1_i32_20, %9 : i32
      %c32_i32 = arith.constant 32 : i32
      %31 = arith.muli %29, %c32_i32 : i32
      %c0_i32_21 = arith.constant 0 : i32
      %c2_i32_22 = arith.constant 2 : i32
      %32 = arith.addi %c0_i32_21, %c2_i32_22 : i32
      %c1_i32_23 = arith.constant 1 : i32
      scf.for %arg8 = %c0_i32_21 to %32 step %c1_i32_23  : i32 {
        %c1_i32_25 = arith.constant 1 : i32
        %33 = arith.muli %arg8, %c1_i32_25 : i32
        %c0_i32_26 = arith.constant 0 : i32
        %34 = arith.addi %c0_i32_26, %33 : i32
        %c4_i32_27 = arith.constant 4 : i32
        %35 = arith.muli %34, %c4_i32_27 : i32
        %c0_i32_28 = arith.constant 0 : i32
        %36 = arith.addi %35, %c0_i32_28 : i32
        %c4_i32_29 = arith.constant 4 : i32
        %37 = arith.muli %36, %c4_i32_29 : i32
        %38 = arith.addi %31, %37 : i32
        %c0_i32_30 = arith.constant 0 : i32
        %39 = arith.addi %38, %c0_i32_30 : i32
        %40 = arith.index_cast %39 : i32 to index
        %41 = memref.load %arg2[%40] : memref<128xi32, #tpu.memory_space<smem>>
        %c0_i32_31 = arith.constant 0 : i32
        %42 = tpu.memref_slice %arg3[%41, %c0_i32_31] : memref<512x128xf32, #tpu.memory_space<any>> -> memref<1x128xf32, #tpu.memory_space<any>>
        %c0_i32_32 = arith.constant 0 : i32
        %c0_i32_33 = arith.constant 0 : i32
        %43 = tpu.memref_slice %arg6[%30, %36, %c0_i32_32, %c0_i32_33] : memref<2x8x4x128xf32, #tpu.memory_space<vmem>> -> memref<1x1x1x128xf32, #tpu.memory_space<vmem>>
        %44 = tpu.memref_squeeze %43 : memref<1x1x1x128xf32, #tpu.memory_space<vmem>> -> memref<1x128xf32, #tpu.memory_space<vmem>>
        %45 = tpu.memref_slice %arg7[%30] : memref<2x!tpu.dma_semaphore, #tpu.memory_space<semaphore_mem>> -> memref<1x!tpu.dma_semaphore, #tpu.memory_space<semaphore_mem>>
        %46 = tpu.memref_squeeze %45 : memref<1x!tpu.dma_semaphore, #tpu.memory_space<semaphore_mem>> -> memref<!tpu.dma_semaphore, #tpu.memory_space<semaphore_mem>>
        tpu.enqueue_dma source(%42 : memref<1x128xf32, #tpu.memory_space<any>>) target(%44 : memref<1x128xf32, #tpu.memory_space<vmem>>) target_semaphore(%46 : memref<!tpu.dma_semaphore, #tpu.memory_space<semaphore_mem>>)
        %c4_i32_34 = arith.constant 4 : i32
        %47 = arith.muli %36, %c4_i32_34 : i32
        %48 = arith.addi %31, %47 : i32
        %c1_i32_35 = arith.constant 1 : i32
        %49 = arith.addi %48, %c1_i32_35 : i32
        %50 = arith.index_cast %49 : i32 to index
        %51 = memref.load %arg2[%50] : memref<128xi32, #tpu.memory_space<smem>>
        %c0_i32_36 = arith.constant 0 : i32
        %52 = tpu.memref_slice %arg3[%51, %c0_i32_36] : memref<512x128xf32, #tpu.memory_space<any>> -> memref<1x128xf32, #tpu.memory_space<any>>
        %c1_i32_37 = arith.constant 1 : i32
        %c0_i32_38 = arith.constant 0 : i32
        %53 = tpu.memref_slice %arg6[%30, %36, %c1_i32_37, %c0_i32_38] : memref<2x8x4x128xf32, #tpu.memory_space<vmem>> -> memref<1x1x1x128xf32, #tpu.memory_space<vmem>>
        %54 = tpu.memref_squeeze %53 : memref<1x1x1x128xf32, #tpu.memory_space<vmem>> -> memref<1x128xf32, #tpu.memory_space<vmem>>
        %55 = tpu.memref_slice %arg7[%30] : memref<2x!tpu.dma_semaphore, #tpu.memory_space<semaphore_mem>> -> memref<1x!tpu.dma_semaphore, #tpu.memory_space<semaphore_mem>>
        %56 = tpu.memref_squeeze %55 : memref<1x!tpu.dma_semaphore, #tpu.memory_space<semaphore_mem>> -> memref<!tpu.dma_semaphore, #tpu.memory_space<semaphore_mem>>
        tpu.enqueue_dma source(%52 : memref<1x128xf32, #tpu.memory_space<any>>) target(%54 : memref<1x128xf32, #tpu.memory_space<vmem>>) target_semaphore(%56 : memref<!tpu.dma_semaphore, #tpu.memory_space<semaphore_mem>>)
        %c4_i32_39 = arith.constant 4 : i32
        %57 = arith.muli %36, %c4_i32_39 : i32
        %58 = arith.addi %31, %57 : i32
        %c2_i32_40 = arith.constant 2 : i32
        %59 = arith.addi %58, %c2_i32_40 : i32
        %60 = arith.index_cast %59 : i32 to index
        %61 = memref.load %arg2[%60] : memref<128xi32, #tpu.memory_space<smem>>
        %c0_i32_41 = arith.constant 0 : i32
        %62 = tpu.memref_slice %arg3[%61, %c0_i32_41] : memref<512x128xf32, #tpu.memory_space<any>> -> memref<1x128xf32, #tpu.memory_space<any>>
        %c2_i32_42 = arith.constant 2 : i32
        %c0_i32_43 = arith.constant 0 : i32
        %63 = tpu.memref_slice %arg6[%30, %36, %c2_i32_42, %c0_i32_43] : memref<2x8x4x128xf32, #tpu.memory_space<vmem>> -> memref<1x1x1x128xf32, #tpu.memory_space<vmem>>
        %64 = tpu.memref_squeeze %63 : memref<1x1x1x128xf32, #tpu.memory_space<vmem>> -> memref<1x128xf32, #tpu.memory_space<vmem>>
        %65 = tpu.memref_slice %arg7[%30] : memref<2x!tpu.dma_semaphore, #tpu.memory_space<semaphore_mem>> -> memref<1x!tpu.dma_semaphore, #tpu.memory_space<semaphore_mem>>
        %66 = tpu.memref_squeeze %65 : memref<1x!tpu.dma_semaphore, #tpu.memory_space<semaphore_mem>> -> memref<!tpu.dma_semaphore, #tpu.memory_space<semaphore_mem>>
        tpu.enqueue_dma source(%62 : memref<1x128xf32, #tpu.memory_space<any>>) target(%64 : memref<1x128xf32, #tpu.memory_space<vmem>>) target_semaphore(%66 : memref<!tpu.dma_semaphore, #tpu.memory_space<semaphore_mem>>)
        %c4_i32_44 = arith.constant 4 : i32
        %67 = arith.muli %36, %c4_i32_44 : i32
        %68 = arith.addi %31, %67 : i32
        %c3_i32 = arith.constant 3 : i32
        %69 = arith.addi %68, %c3_i32 : i32
        %70 = arith.index_cast %69 : i32 to index
        %71 = memref.load %arg2[%70] : memref<128xi32, #tpu.memory_space<smem>>
        %c0_i32_45 = arith.constant 0 : i32
        %72 = tpu.memref_slice %arg3[%71, %c0_i32_45] : memref<512x128xf32, #tpu.memory_space<any>> -> memref<1x128xf32, #tpu.memory_space<any>>
        %c3_i32_46 = arith.constant 3 : i32
        %c0_i32_47 = arith.constant 0 : i32
        %73 = tpu.memref_slice %arg6[%30, %36, %c3_i32_46, %c0_i32_47] : memref<2x8x4x128xf32, #tpu.memory_space<vmem>> -> memref<1x1x1x128xf32, #tpu.memory_space<vmem>>
        %74 = tpu.memref_squeeze %73 : memref<1x1x1x128xf32, #tpu.memory_space<vmem>> -> memref<1x128xf32, #tpu.memory_space<vmem>>
        %75 = tpu.memref_slice %arg7[%30] : memref<2x!tpu.dma_semaphore, #tpu.memory_space<semaphore_mem>> -> memref<1x!tpu.dma_semaphore, #tpu.memory_space<semaphore_mem>>
        %76 = tpu.memref_squeeze %75 : memref<1x!tpu.dma_semaphore, #tpu.memory_space<semaphore_mem>> -> memref<!tpu.dma_semaphore, #tpu.memory_space<semaphore_mem>>
        tpu.enqueue_dma source(%72 : memref<1x128xf32, #tpu.memory_space<any>>) target(%74 : memref<1x128xf32, #tpu.memory_space<vmem>>) target_semaphore(%76 : memref<!tpu.dma_semaphore, #tpu.memory_space<semaphore_mem>>)
        %c4_i32_48 = arith.constant 4 : i32
        %77 = arith.muli %34, %c4_i32_48 : i32
        %c1_i32_49 = arith.constant 1 : i32
        %78 = arith.addi %77, %c1_i32_49 : i32
        %c4_i32_50 = arith.constant 4 : i32
        %79 = arith.muli %78, %c4_i32_50 : i32
        %80 = arith.addi %31, %79 : i32
        %c0_i32_51 = arith.constant 0 : i32
        %81 = arith.addi %80, %c0_i32_51 : i32
        %82 = arith.index_cast %81 : i32 to index
        %83 = memref.load %arg2[%82] : memref<128xi32, #tpu.memory_space<smem>>
        %c0_i32_52 = arith.constant 0 : i32
        %84 = tpu.memref_slice %arg3[%83, %c0_i32_52] : memref<512x128xf32, #tpu.memory_space<any>> -> memref<1x128xf32, #tpu.memory_space<any>>
        %c0_i32_53 = arith.constant 0 : i32
        %c0_i32_54 = arith.constant 0 : i32
        %85 = tpu.memref_slice %arg6[%30, %78, %c0_i32_53, %c0_i32_54] : memref<2x8x4x128xf32, #tpu.memory_space<vmem>> -> memref<1x1x1x128xf32, #tpu.memory_space<vmem>>
        %86 = tpu.memref_squeeze %85 : memref<1x1x1x128xf32, #tpu.memory_space<vmem>> -> memref<1x128xf32, #tpu.memory_space<vmem>>
        %87 = tpu.memref_slice %arg7[%30] : memref<2x!tpu.dma_semaphore, #tpu.memory_space<semaphore_mem>> -> memref<1x!tpu.dma_semaphore, #tpu.memory_space<semaphore_mem>>
        %88 = tpu.memref_squeeze %87 : memref<1x!tpu.dma_semaphore, #tpu.memory_space<semaphore_mem>> -> memref<!tpu.dma_semaphore, #tpu.memory_space<semaphore_mem>>
        tpu.enqueue_dma source(%84 : memref<1x128xf32, #tpu.memory_space<any>>) target(%86 : memref<1x128xf32, #tpu.memory_space<vmem>>) target_semaphore(%88 : memref<!tpu.dma_semaphore, #tpu.memory_space<semaphore_mem>>)
        %c4_i32_55 = arith.constant 4 : i32
        %89 = arith.muli %78, %c4_i32_55 : i32
        %90 = arith.addi %31, %89 : i32
        %c1_i32_56 = arith.constant 1 : i32
        %91 = arith.addi %90, %c1_i32_56 : i32
        %92 = arith.index_cast %91 : i32 to index
        %93 = memref.load %arg2[%92] : memref<128xi32, #tpu.memory_space<smem>>
        %c0_i32_57 = arith.constant 0 : i32
        %94 = tpu.memref_slice %arg3[%93, %c0_i32_57] : memref<512x128xf32, #tpu.memory_space<any>> -> memref<1x128xf32, #tpu.memory_space<any>>
        %c1_i32_58 = arith.constant 1 : i32
        %c0_i32_59 = arith.constant 0 : i32
        %95 = tpu.memref_slice %arg6[%30, %78, %c1_i32_58, %c0_i32_59] : memref<2x8x4x128xf32, #tpu.memory_space<vmem>> -> memref<1x1x1x128xf32, #tpu.memory_space<vmem>>
        %96 = tpu.memref_squeeze %95 : memref<1x1x1x128xf32, #tpu.memory_space<vmem>> -> memref<1x128xf32, #tpu.memory_space<vmem>>
        %97 = tpu.memref_slice %arg7[%30] : memref<2x!tpu.dma_semaphore, #tpu.memory_space<semaphore_mem>> -> memref<1x!tpu.dma_semaphore, #tpu.memory_space<semaphore_mem>>
        %98 = tpu.memref_squeeze %97 : memref<1x!tpu.dma_semaphore, #tpu.memory_space<semaphore_mem>> -> memref<!tpu.dma_semaphore, #tpu.memory_space<semaphore_mem>>
        tpu.enqueue_dma source(%94 : memref<1x128xf32, #tpu.memory_space<any>>) target(%96 : memref<1x128xf32, #tpu.memory_space<vmem>>) target_semaphore(%98 : memref<!tpu.dma_semaphore, #tpu.memory_space<semaphore_mem>>)
        %c4_i32_60 = arith.constant 4 : i32
        %99 = arith.muli %78, %c4_i32_60 : i32
        %100 = arith.addi %31, %99 : i32
        %c2_i32_61 = arith.constant 2 : i32
        %101 = arith.addi %100, %c2_i32_61 : i32
        %102 = arith.index_cast %101 : i32 to index
        %103 = memref.load %arg2[%102] : memref<128xi32, #tpu.memory_space<smem>>
        %c0_i32_62 = arith.constant 0 : i32
        %104 = tpu.memref_slice %arg3[%103, %c0_i32_62] : memref<512x128xf32, #tpu.memory_space<any>> -> memref<1x128xf32, #tpu.memory_space<any>>
        %c2_i32_63 = arith.constant 2 : i32
        %c0_i32_64 = arith.constant 0 : i32
        %105 = tpu.memref_slice %arg6[%30, %78, %c2_i32_63, %c0_i32_64] : memref<2x8x4x128xf32, #tpu.memory_space<vmem>> -> memref<1x1x1x128xf32, #tpu.memory_space<vmem>>
        %106 = tpu.memref_squeeze %105 : memref<1x1x1x128xf32, #tpu.memory_space<vmem>> -> memref<1x128xf32, #tpu.memory_space<vmem>>
        %107 = tpu.memref_slice %arg7[%30] : memref<2x!tpu.dma_semaphore, #tpu.memory_space<semaphore_mem>> -> memref<1x!tpu.dma_semaphore, #tpu.memory_space<semaphore_mem>>
        %108 = tpu.memref_squeeze %107 : memref<1x!tpu.dma_semaphore, #tpu.memory_space<semaphore_mem>> -> memref<!tpu.dma_semaphore, #tpu.memory_space<semaphore_mem>>
        tpu.enqueue_dma source(%104 : memref<1x128xf32, #tpu.memory_space<any>>) target(%106 : memref<1x128xf32, #tpu.memory_space<vmem>>) target_semaphore(%108 : memref<!tpu.dma_semaphore, #tpu.memory_space<semaphore_mem>>)
        %c4_i32_65 = arith.constant 4 : i32
        %109 = arith.muli %78, %c4_i32_65 : i32
        %110 = arith.addi %31, %109 : i32
        %c3_i32_66 = arith.constant 3 : i32
        %111 = arith.addi %110, %c3_i32_66 : i32
        %112 = arith.index_cast %111 : i32 to index
        %113 = memref.load %arg2[%112] : memref<128xi32, #tpu.memory_space<smem>>
        %c0_i32_67 = arith.constant 0 : i32
        %114 = tpu.memref_slice %arg3[%113, %c0_i32_67] : memref<512x128xf32, #tpu.memory_space<any>> -> memref<1x128xf32, #tpu.memory_space<any>>
        %c3_i32_68 = arith.constant 3 : i32
        %c0_i32_69 = arith.constant 0 : i32
        %115 = tpu.memref_slice %arg6[%30, %78, %c3_i32_68, %c0_i32_69] : memref<2x8x4x128xf32, #tpu.memory_space<vmem>> -> memref<1x1x1x128xf32, #tpu.memory_space<vmem>>
        %116 = tpu.memref_squeeze %115 : memref<1x1x1x128xf32, #tpu.memory_space<vmem>> -> memref<1x128xf32, #tpu.memory_space<vmem>>
        %117 = tpu.memref_slice %arg7[%30] : memref<2x!tpu.dma_semaphore, #tpu.memory_space<semaphore_mem>> -> memref<1x!tpu.dma_semaphore, #tpu.memory_space<semaphore_mem>>
        %118 = tpu.memref_squeeze %117 : memref<1x!tpu.dma_semaphore, #tpu.memory_space<semaphore_mem>> -> memref<!tpu.dma_semaphore, #tpu.memory_space<semaphore_mem>>
        tpu.enqueue_dma source(%114 : memref<1x128xf32, #tpu.memory_space<any>>) target(%116 : memref<1x128xf32, #tpu.memory_space<vmem>>) target_semaphore(%118 : memref<!tpu.dma_semaphore, #tpu.memory_space<semaphore_mem>>)
        %c4_i32_70 = arith.constant 4 : i32
        %119 = arith.muli %34, %c4_i32_70 : i32
        %c2_i32_71 = arith.constant 2 : i32
        %120 = arith.addi %119, %c2_i32_71 : i32
        %c4_i32_72 = arith.constant 4 : i32
        %121 = arith.muli %120, %c4_i32_72 : i32
        %122 = arith.addi %31, %121 : i32
        %c0_i32_73 = arith.constant 0 : i32
        %123 = arith.addi %122, %c0_i32_73 : i32
        %124 = arith.index_cast %123 : i32 to index
        %125 = memref.load %arg2[%124] : memref<128xi32, #tpu.memory_space<smem>>
        %c0_i32_74 = arith.constant 0 : i32
        %126 = tpu.memref_slice %arg3[%125, %c0_i32_74] : memref<512x128xf32, #tpu.memory_space<any>> -> memref<1x128xf32, #tpu.memory_space<any>>
        %c0_i32_75 = arith.constant 0 : i32
        %c0_i32_76 = arith.constant 0 : i32
        %127 = tpu.memref_slice %arg6[%30, %120, %c0_i32_75, %c0_i32_76] : memref<2x8x4x128xf32, #tpu.memory_space<vmem>> -> memref<1x1x1x128xf32, #tpu.memory_space<vmem>>
        %128 = tpu.memref_squeeze %127 : memref<1x1x1x128xf32, #tpu.memory_space<vmem>> -> memref<1x128xf32, #tpu.memory_space<vmem>>
        %129 = tpu.memref_slice %arg7[%30] : memref<2x!tpu.dma_semaphore, #tpu.memory_space<semaphore_mem>> -> memref<1x!tpu.dma_semaphore, #tpu.memory_space<semaphore_mem>>
        %130 = tpu.memref_squeeze %129 : memref<1x!tpu.dma_semaphore, #tpu.memory_space<semaphore_mem>> -> memref<!tpu.dma_semaphore, #tpu.memory_space<semaphore_mem>>
        tpu.enqueue_dma source(%126 : memref<1x128xf32, #tpu.memory_space<any>>) target(%128 : memref<1x128xf32, #tpu.memory_space<vmem>>) target_semaphore(%130 : memref<!tpu.dma_semaphore, #tpu.memory_space<semaphore_mem>>)
        %c4_i32_77 = arith.constant 4 : i32
        %131 = arith.muli %120, %c4_i32_77 : i32
        %132 = arith.addi %31, %131 : i32
        %c1_i32_78 = arith.constant 1 : i32
        %133 = arith.addi %132, %c1_i32_78 : i32
        %134 = arith.index_cast %133 : i32 to index
        %135 = memref.load %arg2[%134] : memref<128xi32, #tpu.memory_space<smem>>
        %c0_i32_79 = arith.constant 0 : i32
        %136 = tpu.memref_slice %arg3[%135, %c0_i32_79] : memref<512x128xf32, #tpu.memory_space<any>> -> memref<1x128xf32, #tpu.memory_space<any>>
        %c1_i32_80 = arith.constant 1 : i32
        %c0_i32_81 = arith.constant 0 : i32
        %137 = tpu.memref_slice %arg6[%30, %120, %c1_i32_80, %c0_i32_81] : memref<2x8x4x128xf32, #tpu.memory_space<vmem>> -> memref<1x1x1x128xf32, #tpu.memory_space<vmem>>
        %138 = tpu.memref_squeeze %137 : memref<1x1x1x128xf32, #tpu.memory_space<vmem>> -> memref<1x128xf32, #tpu.memory_space<vmem>>
        %139 = tpu.memref_slice %arg7[%30] : memref<2x!tpu.dma_semaphore, #tpu.memory_space<semaphore_mem>> -> memref<1x!tpu.dma_semaphore, #tpu.memory_space<semaphore_mem>>
        %140 = tpu.memref_squeeze %139 : memref<1x!tpu.dma_semaphore, #tpu.memory_space<semaphore_mem>> -> memref<!tpu.dma_semaphore, #tpu.memory_space<semaphore_mem>>
        tpu.enqueue_dma source(%136 : memref<1x128xf32, #tpu.memory_space<any>>) target(%138 : memref<1x128xf32, #tpu.memory_space<vmem>>) target_semaphore(%140 : memref<!tpu.dma_semaphore, #tpu.memory_space<semaphore_mem>>)
        %c4_i32_82 = arith.constant 4 : i32
        %141 = arith.muli %120, %c4_i32_82 : i32
        %142 = arith.addi %31, %141 : i32
        %c2_i32_83 = arith.constant 2 : i32
        %143 = arith.addi %142, %c2_i32_83 : i32
        %144 = arith.index_cast %143 : i32 to index
        %145 = memref.load %arg2[%144] : memref<128xi32, #tpu.memory_space<smem>>
        %c0_i32_84 = arith.constant 0 : i32
        %146 = tpu.memref_slice %arg3[%145, %c0_i32_84] : memref<512x128xf32, #tpu.memory_space<any>> -> memref<1x128xf32, #tpu.memory_space<any>>
        %c2_i32_85 = arith.constant 2 : i32
        %c0_i32_86 = arith.constant 0 : i32
        %147 = tpu.memref_slice %arg6[%30, %120, %c2_i32_85, %c0_i32_86] : memref<2x8x4x128xf32, #tpu.memory_space<vmem>> -> memref<1x1x1x128xf32, #tpu.memory_space<vmem>>
        %148 = tpu.memref_squeeze %147 : memref<1x1x1x128xf32, #tpu.memory_space<vmem>> -> memref<1x128xf32, #tpu.memory_space<vmem>>
        %149 = tpu.memref_slice %arg7[%30] : memref<2x!tpu.dma_semaphore, #tpu.memory_space<semaphore_mem>> -> memref<1x!tpu.dma_semaphore, #tpu.memory_space<semaphore_mem>>
        %150 = tpu.memref_squeeze %149 : memref<1x!tpu.dma_semaphore, #tpu.memory_space<semaphore_mem>> -> memref<!tpu.dma_semaphore, #tpu.memory_space<semaphore_mem>>
        tpu.enqueue_dma source(%146 : memref<1x128xf32, #tpu.memory_space<any>>) target(%148 : memref<1x128xf32, #tpu.memory_space<vmem>>) target_semaphore(%150 : memref<!tpu.dma_semaphore, #tpu.memory_space<semaphore_mem>>)
        %c4_i32_87 = arith.constant 4 : i32
        %151 = arith.muli %120, %c4_i32_87 : i32
        %152 = arith.addi %31, %151 : i32
        %c3_i32_88 = arith.constant 3 : i32
        %153 = arith.addi %152, %c3_i32_88 : i32
        %154 = arith.index_cast %153 : i32 to index
        %155 = memref.load %arg2[%154] : memref<128xi32, #tpu.memory_space<smem>>
        %c0_i32_89 = arith.constant 0 : i32
        %156 = tpu.memref_slice %arg3[%155, %c0_i32_89] : memref<512x128xf32, #tpu.memory_space<any>> -> memref<1x128xf32, #tpu.memory_space<any>>
        %c3_i32_90 = arith.constant 3 : i32
        %c0_i32_91 = arith.constant 0 : i32
        %157 = tpu.memref_slice %arg6[%30, %120, %c3_i32_90, %c0_i32_91] : memref<2x8x4x128xf32, #tpu.memory_space<vmem>> -> memref<1x1x1x128xf32, #tpu.memory_space<vmem>>
        %158 = tpu.memref_squeeze %157 : memref<1x1x1x128xf32, #tpu.memory_space<vmem>> -> memref<1x128xf32, #tpu.memory_space<vmem>>
        %159 = tpu.memref_slice %arg7[%30] : memref<2x!tpu.dma_semaphore, #tpu.memory_space<semaphore_mem>> -> memref<1x!tpu.dma_semaphore, #tpu.memory_space<semaphore_mem>>
        %160 = tpu.memref_squeeze %159 : memref<1x!tpu.dma_semaphore, #tpu.memory_space<semaphore_mem>> -> memref<!tpu.dma_semaphore, #tpu.memory_space<semaphore_mem>>
        tpu.enqueue_dma source(%156 : memref<1x128xf32, #tpu.memory_space<any>>) target(%158 : memref<1x128xf32, #tpu.memory_space<vmem>>) target_semaphore(%160 : memref<!tpu.dma_semaphore, #tpu.memory_space<semaphore_mem>>)
        %c4_i32_92 = arith.constant 4 : i32
        %161 = arith.muli %34, %c4_i32_92 : i32
        %c3_i32_93 = arith.constant 3 : i32
        %162 = arith.addi %161, %c3_i32_93 : i32
        %c4_i32_94 = arith.constant 4 : i32
        %163 = arith.muli %162, %c4_i32_94 : i32
        %164 = arith.addi %31, %163 : i32
        %c0_i32_95 = arith.constant 0 : i32
        %165 = arith.addi %164, %c0_i32_95 : i32
        %166 = arith.index_cast %165 : i32 to index
        %167 = memref.load %arg2[%166] : memref<128xi32, #tpu.memory_space<smem>>
        %c0_i32_96 = arith.constant 0 : i32
        %168 = tpu.memref_slice %arg3[%167, %c0_i32_96] : memref<512x128xf32, #tpu.memory_space<any>> -> memref<1x128xf32, #tpu.memory_space<any>>
        %c0_i32_97 = arith.constant 0 : i32
        %c0_i32_98 = arith.constant 0 : i32
        %169 = tpu.memref_slice %arg6[%30, %162, %c0_i32_97, %c0_i32_98] : memref<2x8x4x128xf32, #tpu.memory_space<vmem>> -> memref<1x1x1x128xf32, #tpu.memory_space<vmem>>
        %170 = tpu.memref_squeeze %169 : memref<1x1x1x128xf32, #tpu.memory_space<vmem>> -> memref<1x128xf32, #tpu.memory_space<vmem>>
        %171 = tpu.memref_slice %arg7[%30] : memref<2x!tpu.dma_semaphore, #tpu.memory_space<semaphore_mem>> -> memref<1x!tpu.dma_semaphore, #tpu.memory_space<semaphore_mem>>
        %172 = tpu.memref_squeeze %171 : memref<1x!tpu.dma_semaphore, #tpu.memory_space<semaphore_mem>> -> memref<!tpu.dma_semaphore, #tpu.memory_space<semaphore_mem>>
        tpu.enqueue_dma source(%168 : memref<1x128xf32, #tpu.memory_space<any>>) target(%170 : memref<1x128xf32, #tpu.memory_space<vmem>>) target_semaphore(%172 : memref<!tpu.dma_semaphore, #tpu.memory_space<semaphore_mem>>)
        %c4_i32_99 = arith.constant 4 : i32
        %173 = arith.muli %162, %c4_i32_99 : i32
        %174 = arith.addi %31, %173 : i32
        %c1_i32_100 = arith.constant 1 : i32
        %175 = arith.addi %174, %c1_i32_100 : i32
        %176 = arith.index_cast %175 : i32 to index
        %177 = memref.load %arg2[%176] : memref<128xi32, #tpu.memory_space<smem>>
        %c0_i32_101 = arith.constant 0 : i32
        %178 = tpu.memref_slice %arg3[%177, %c0_i32_101] : memref<512x128xf32, #tpu.memory_space<any>> -> memref<1x128xf32, #tpu.memory_space<any>>
        %c1_i32_102 = arith.constant 1 : i32
        %c0_i32_103 = arith.constant 0 : i32
        %179 = tpu.memref_slice %arg6[%30, %162, %c1_i32_102, %c0_i32_103] : memref<2x8x4x128xf32, #tpu.memory_space<vmem>> -> memref<1x1x1x128xf32, #tpu.memory_space<vmem>>
        %180 = tpu.memref_squeeze %179 : memref<1x1x1x128xf32, #tpu.memory_space<vmem>> -> memref<1x128xf32, #tpu.memory_space<vmem>>
        %181 = tpu.memref_slice %arg7[%30] : memref<2x!tpu.dma_semaphore, #tpu.memory_space<semaphore_mem>> -> memref<1x!tpu.dma_semaphore, #tpu.memory_space<semaphore_mem>>
        %182 = tpu.memref_squeeze %181 : memref<1x!tpu.dma_semaphore, #tpu.memory_space<semaphore_mem>> -> memref<!tpu.dma_semaphore, #tpu.memory_space<semaphore_mem>>
        tpu.enqueue_dma source(%178 : memref<1x128xf32, #tpu.memory_space<any>>) target(%180 : memref<1x128xf32, #tpu.memory_space<vmem>>) target_semaphore(%182 : memref<!tpu.dma_semaphore, #tpu.memory_space<semaphore_mem>>)
        %c4_i32_104 = arith.constant 4 : i32
        %183 = arith.muli %162, %c4_i32_104 : i32
        %184 = arith.addi %31, %183 : i32
        %c2_i32_105 = arith.constant 2 : i32
        %185 = arith.addi %184, %c2_i32_105 : i32
        %186 = arith.index_cast %185 : i32 to index
        %187 = memref.load %arg2[%186] : memref<128xi32, #tpu.memory_space<smem>>
        %c0_i32_106 = arith.constant 0 : i32
        %188 = tpu.memref_slice %arg3[%187, %c0_i32_106] : memref<512x128xf32, #tpu.memory_space<any>> -> memref<1x128xf32, #tpu.memory_space<any>>
        %c2_i32_107 = arith.constant 2 : i32
        %c0_i32_108 = arith.constant 0 : i32
        %189 = tpu.memref_slice %arg6[%30, %162, %c2_i32_107, %c0_i32_108] : memref<2x8x4x128xf32, #tpu.memory_space<vmem>> -> memref<1x1x1x128xf32, #tpu.memory_space<vmem>>
        %190 = tpu.memref_squeeze %189 : memref<1x1x1x128xf32, #tpu.memory_space<vmem>> -> memref<1x128xf32, #tpu.memory_space<vmem>>
        %191 = tpu.memref_slice %arg7[%30] : memref<2x!tpu.dma_semaphore, #tpu.memory_space<semaphore_mem>> -> memref<1x!tpu.dma_semaphore, #tpu.memory_space<semaphore_mem>>
        %192 = tpu.memref_squeeze %191 : memref<1x!tpu.dma_semaphore, #tpu.memory_space<semaphore_mem>> -> memref<!tpu.dma_semaphore, #tpu.memory_space<semaphore_mem>>
        tpu.enqueue_dma source(%188 : memref<1x128xf32, #tpu.memory_space<any>>) target(%190 : memref<1x128xf32, #tpu.memory_space<vmem>>) target_semaphore(%192 : memref<!tpu.dma_semaphore, #tpu.memory_space<semaphore_mem>>)
        %c4_i32_109 = arith.constant 4 : i32
        %193 = arith.muli %162, %c4_i32_109 : i32
        %194 = arith.addi %31, %193 : i32
        %c3_i32_110 = arith.constant 3 : i32
        %195 = arith.addi %194, %c3_i32_110 : i32
        %196 = arith.index_cast %195 : i32 to index
        %197 = memref.load %arg2[%196] : memref<128xi32, #tpu.memory_space<smem>>
        %c0_i32_111 = arith.constant 0 : i32
        %198 = tpu.memref_slice %arg3[%197, %c0_i32_111] : memref<512x128xf32, #tpu.memory_space<any>> -> memref<1x128xf32, #tpu.memory_space<any>>
        %c3_i32_112 = arith.constant 3 : i32
        %c0_i32_113 = arith.constant 0 : i32
        %199 = tpu.memref_slice %arg6[%30, %162, %c3_i32_112, %c0_i32_113] : memref<2x8x4x128xf32, #tpu.memory_space<vmem>> -> memref<1x1x1x128xf32, #tpu.memory_space<vmem>>
        %200 = tpu.memref_squeeze %199 : memref<1x1x1x128xf32, #tpu.memory_space<vmem>> -> memref<1x128xf32, #tpu.memory_space<vmem>>
        %201 = tpu.memref_slice %arg7[%30] : memref<2x!tpu.dma_semaphore, #tpu.memory_space<semaphore_mem>> -> memref<1x!tpu.dma_semaphore, #tpu.memory_space<semaphore_mem>>
        %202 = tpu.memref_squeeze %201 : memref<1x!tpu.dma_semaphore, #tpu.memory_space<semaphore_mem>> -> memref<!tpu.dma_semaphore, #tpu.memory_space<semaphore_mem>>
        tpu.enqueue_dma source(%198 : memref<1x128xf32, #tpu.memory_space<any>>) target(%200 : memref<1x128xf32, #tpu.memory_space<vmem>>) target_semaphore(%202 : memref<!tpu.dma_semaphore, #tpu.memory_space<semaphore_mem>>)
      }
      %c2_i32_24 = arith.constant 2 : i32
    } else {
    }
    %c0_i32_9 = arith.constant 0 : i32
    %c4_i32 = arith.constant 4 : i32
    %19 = arith.addi %c0_i32_9, %c4_i32 : i32
    %c1_i32_10 = arith.constant 1 : i32
    scf.for %arg8 = %c0_i32_9 to %19 step %c1_i32_10  : i32 {
      %c0_i32_19 = arith.constant 0 : i32
      %c0_i32_20 = arith.constant 0 : i32
      %c0_i32_21 = arith.constant 0 : i32
      %29 = tpu.memref_slice %arg3[%c0_i32_20, %c0_i32_21] : memref<512x128xf32, #tpu.memory_space<any>> -> memref<1x128xf32, #tpu.memory_space<any>>
      %c0_i32_22 = arith.constant 0 : i32
      %c0_i32_23 = arith.constant 0 : i32
      %30 = tpu.memref_slice %arg6[%9, %c0_i32_19, %c0_i32_22, %c0_i32_23] : memref<2x8x4x128xf32, #tpu.memory_space<vmem>> -> memref<1x1x1x128xf32, #tpu.memory_space<vmem>>
      %31 = tpu.memref_squeeze %30 : memref<1x1x1x128xf32, #tpu.memory_space<vmem>> -> memref<1x128xf32, #tpu.memory_space<vmem>>
      %32 = tpu.memref_slice %arg7[%9] : memref<2x!tpu.dma_semaphore, #tpu.memory_space<semaphore_mem>> -> memref<1x!tpu.dma_semaphore, #tpu.memory_space<semaphore_mem>>
      %33 = tpu.memref_squeeze %32 : memref<1x!tpu.dma_semaphore, #tpu.memory_space<semaphore_mem>> -> memref<!tpu.dma_semaphore, #tpu.memory_space<semaphore_mem>>
      tpu.wait_dma2 semaphore(%33 : memref<!tpu.dma_semaphore, #tpu.memory_space<semaphore_mem>>) src(%29 : memref<1x128xf32, #tpu.memory_space<any>>) dst(%31 : memref<1x128xf32, #tpu.memory_space<vmem>>)
      %c0_i32_24 = arith.constant 0 : i32
      %c0_i32_25 = arith.constant 0 : i32
      %c0_i32_26 = arith.constant 0 : i32
      %34 = tpu.memref_slice %arg3[%c0_i32_25, %c0_i32_26] : memref<512x128xf32, #tpu.memory_space<any>> -> memref<1x128xf32, #tpu.memory_space<any>>
      %c0_i32_27 = arith.constant 0 : i32
      %c0_i32_28 = arith.constant 0 : i32
      %35 = tpu.memref_slice %arg6[%9, %c0_i32_24, %c0_i32_27, %c0_i32_28] : memref<2x8x4x128xf32, #tpu.memory_space<vmem>> -> memref<1x1x1x128xf32, #tpu.memory_space<vmem>>
      %36 = tpu.memref_squeeze %35 : memref<1x1x1x128xf32, #tpu.memory_space<vmem>> -> memref<1x128xf32, #tpu.memory_space<vmem>>
      %37 = tpu.memref_slice %arg7[%9] : memref<2x!tpu.dma_semaphore, #tpu.memory_space<semaphore_mem>> -> memref<1x!tpu.dma_semaphore, #tpu.memory_space<semaphore_mem>>
      %38 = tpu.memref_squeeze %37 : memref<1x!tpu.dma_semaphore, #tpu.memory_space<semaphore_mem>> -> memref<!tpu.dma_semaphore, #tpu.memory_space<semaphore_mem>>
      tpu.wait_dma2 semaphore(%38 : memref<!tpu.dma_semaphore, #tpu.memory_space<semaphore_mem>>) src(%34 : memref<1x128xf32, #tpu.memory_space<any>>) dst(%36 : memref<1x128xf32, #tpu.memory_space<vmem>>)
      %c0_i32_29 = arith.constant 0 : i32
      %c0_i32_30 = arith.constant 0 : i32
      %c0_i32_31 = arith.constant 0 : i32
      %39 = tpu.memref_slice %arg3[%c0_i32_30, %c0_i32_31] : memref<512x128xf32, #tpu.memory_space<any>> -> memref<1x128xf32, #tpu.memory_space<any>>
      %c0_i32_32 = arith.constant 0 : i32
      %c0_i32_33 = arith.constant 0 : i32
      %40 = tpu.memref_slice %arg6[%9, %c0_i32_29, %c0_i32_32, %c0_i32_33] : memref<2x8x4x128xf32, #tpu.memory_space<vmem>> -> memref<1x1x1x128xf32, #tpu.memory_space<vmem>>
      %41 = tpu.memref_squeeze %40 : memref<1x1x1x128xf32, #tpu.memory_space<vmem>> -> memref<1x128xf32, #tpu.memory_space<vmem>>
      %42 = tpu.memref_slice %arg7[%9] : memref<2x!tpu.dma_semaphore, #tpu.memory_space<semaphore_mem>> -> memref<1x!tpu.dma_semaphore, #tpu.memory_space<semaphore_mem>>
      %43 = tpu.memref_squeeze %42 : memref<1x!tpu.dma_semaphore, #tpu.memory_space<semaphore_mem>> -> memref<!tpu.dma_semaphore, #tpu.memory_space<semaphore_mem>>
      tpu.wait_dma2 semaphore(%43 : memref<!tpu.dma_semaphore, #tpu.memory_space<semaphore_mem>>) src(%39 : memref<1x128xf32, #tpu.memory_space<any>>) dst(%41 : memref<1x128xf32, #tpu.memory_space<vmem>>)
      %c0_i32_34 = arith.constant 0 : i32
      %c0_i32_35 = arith.constant 0 : i32
      %c0_i32_36 = arith.constant 0 : i32
      %44 = tpu.memref_slice %arg3[%c0_i32_35, %c0_i32_36] : memref<512x128xf32, #tpu.memory_space<any>> -> memref<1x128xf32, #tpu.memory_space<any>>
      %c0_i32_37 = arith.constant 0 : i32
      %c0_i32_38 = arith.constant 0 : i32
      %45 = tpu.memref_slice %arg6[%9, %c0_i32_34, %c0_i32_37, %c0_i32_38] : memref<2x8x4x128xf32, #tpu.memory_space<vmem>> -> memref<1x1x1x128xf32, #tpu.memory_space<vmem>>
      %46 = tpu.memref_squeeze %45 : memref<1x1x1x128xf32, #tpu.memory_space<vmem>> -> memref<1x128xf32, #tpu.memory_space<vmem>>
      %47 = tpu.memref_slice %arg7[%9] : memref<2x!tpu.dma_semaphore, #tpu.memory_space<semaphore_mem>> -> memref<1x!tpu.dma_semaphore, #tpu.memory_space<semaphore_mem>>
      %48 = tpu.memref_squeeze %47 : memref<1x!tpu.dma_semaphore, #tpu.memory_space<semaphore_mem>> -> memref<!tpu.dma_semaphore, #tpu.memory_space<semaphore_mem>>
      tpu.wait_dma2 semaphore(%48 : memref<!tpu.dma_semaphore, #tpu.memory_space<semaphore_mem>>) src(%44 : memref<1x128xf32, #tpu.memory_space<any>>) dst(%46 : memref<1x128xf32, #tpu.memory_space<vmem>>)
      %c0_i32_39 = arith.constant 0 : i32
      %c0_i32_40 = arith.constant 0 : i32
      %c0_i32_41 = arith.constant 0 : i32
      %49 = tpu.memref_slice %arg3[%c0_i32_40, %c0_i32_41] : memref<512x128xf32, #tpu.memory_space<any>> -> memref<1x128xf32, #tpu.memory_space<any>>
      %c0_i32_42 = arith.constant 0 : i32
      %c0_i32_43 = arith.constant 0 : i32
      %50 = tpu.memref_slice %arg6[%9, %c0_i32_39, %c0_i32_42, %c0_i32_43] : memref<2x8x4x128xf32, #tpu.memory_space<vmem>> -> memref<1x1x1x128xf32, #tpu.memory_space<vmem>>
      %51 = tpu.memref_squeeze %50 : memref<1x1x1x128xf32, #tpu.memory_space<vmem>> -> memref<1x128xf32, #tpu.memory_space<vmem>>
      %52 = tpu.memref_slice %arg7[%9] : memref<2x!tpu.dma_semaphore, #tpu.memory_space<semaphore_mem>> -> memref<1x!tpu.dma_semaphore, #tpu.memory_space<semaphore_mem>>
      %53 = tpu.memref_squeeze %52 : memref<1x!tpu.dma_semaphore, #tpu.memory_space<semaphore_mem>> -> memref<!tpu.dma_semaphore, #tpu.memory_space<semaphore_mem>>
      tpu.wait_dma2 semaphore(%53 : memref<!tpu.dma_semaphore, #tpu.memory_space<semaphore_mem>>) src(%49 : memref<1x128xf32, #tpu.memory_space<any>>) dst(%51 : memref<1x128xf32, #tpu.memory_space<vmem>>)
      %c0_i32_44 = arith.constant 0 : i32
      %c0_i32_45 = arith.constant 0 : i32
      %c0_i32_46 = arith.constant 0 : i32
      %54 = tpu.memref_slice %arg3[%c0_i32_45, %c0_i32_46] : memref<512x128xf32, #tpu.memory_space<any>> -> memref<1x128xf32, #tpu.memory_space<any>>
      %c0_i32_47 = arith.constant 0 : i32
      %c0_i32_48 = arith.constant 0 : i32
      %55 = tpu.memref_slice %arg6[%9, %c0_i32_44, %c0_i32_47, %c0_i32_48] : memref<2x8x4x128xf32, #tpu.memory_space<vmem>> -> memref<1x1x1x128xf32, #tpu.memory_space<vmem>>
      %56 = tpu.memref_squeeze %55 : memref<1x1x1x128xf32, #tpu.memory_space<vmem>> -> memref<1x128xf32, #tpu.memory_space<vmem>>
      %57 = tpu.memref_slice %arg7[%9] : memref<2x!tpu.dma_semaphore, #tpu.memory_space<semaphore_mem>> -> memref<1x!tpu.dma_semaphore, #tpu.memory_space<semaphore_mem>>
      %58 = tpu.memref_squeeze %57 : memref<1x!tpu.dma_semaphore, #tpu.memory_space<semaphore_mem>> -> memref<!tpu.dma_semaphore, #tpu.memory_space<semaphore_mem>>
      tpu.wait_dma2 semaphore(%58 : memref<!tpu.dma_semaphore, #tpu.memory_space<semaphore_mem>>) src(%54 : memref<1x128xf32, #tpu.memory_space<any>>) dst(%56 : memref<1x128xf32, #tpu.memory_space<vmem>>)
      %c0_i32_49 = arith.constant 0 : i32
      %c0_i32_50 = arith.constant 0 : i32
      %c0_i32_51 = arith.constant 0 : i32
      %59 = tpu.memref_slice %arg3[%c0_i32_50, %c0_i32_51] : memref<512x128xf32, #tpu.memory_space<any>> -> memref<1x128xf32, #tpu.memory_space<any>>
      %c0_i32_52 = arith.constant 0 : i32
      %c0_i32_53 = arith.constant 0 : i32
      %60 = tpu.memref_slice %arg6[%9, %c0_i32_49, %c0_i32_52, %c0_i32_53] : memref<2x8x4x128xf32, #tpu.memory_space<vmem>> -> memref<1x1x1x128xf32, #tpu.memory_space<vmem>>
      %61 = tpu.memref_squeeze %60 : memref<1x1x1x128xf32, #tpu.memory_space<vmem>> -> memref<1x128xf32, #tpu.memory_space<vmem>>
      %62 = tpu.memref_slice %arg7[%9] : memref<2x!tpu.dma_semaphore, #tpu.memory_space<semaphore_mem>> -> memref<1x!tpu.dma_semaphore, #tpu.memory_space<semaphore_mem>>
      %63 = tpu.memref_squeeze %62 : memref<1x!tpu.dma_semaphore, #tpu.memory_space<semaphore_mem>> -> memref<!tpu.dma_semaphore, #tpu.memory_space<semaphore_mem>>
      tpu.wait_dma2 semaphore(%63 : memref<!tpu.dma_semaphore, #tpu.memory_space<semaphore_mem>>) src(%59 : memref<1x128xf32, #tpu.memory_space<any>>) dst(%61 : memref<1x128xf32, #tpu.memory_space<vmem>>)
      %c0_i32_54 = arith.constant 0 : i32
      %c0_i32_55 = arith.constant 0 : i32
      %c0_i32_56 = arith.constant 0 : i32
      %64 = tpu.memref_slice %arg3[%c0_i32_55, %c0_i32_56] : memref<512x128xf32, #tpu.memory_space<any>> -> memref<1x128xf32, #tpu.memory_space<any>>
      %c0_i32_57 = arith.constant 0 : i32
      %c0_i32_58 = arith.constant 0 : i32
      %65 = tpu.memref_slice %arg6[%9, %c0_i32_54, %c0_i32_57, %c0_i32_58] : memref<2x8x4x128xf32, #tpu.memory_space<vmem>> -> memref<1x1x1x128xf32, #tpu.memory_space<vmem>>
      %66 = tpu.memref_squeeze %65 : memref<1x1x1x128xf32, #tpu.memory_space<vmem>> -> memref<1x128xf32, #tpu.memory_space<vmem>>
      %67 = tpu.memref_slice %arg7[%9] : memref<2x!tpu.dma_semaphore, #tpu.memory_space<semaphore_mem>> -> memref<1x!tpu.dma_semaphore, #tpu.memory_space<semaphore_mem>>
      %68 = tpu.memref_squeeze %67 : memref<1x!tpu.dma_semaphore, #tpu.memory_space<semaphore_mem>> -> memref<!tpu.dma_semaphore, #tpu.memory_space<semaphore_mem>>
      tpu.wait_dma2 semaphore(%68 : memref<!tpu.dma_semaphore, #tpu.memory_space<semaphore_mem>>) src(%64 : memref<1x128xf32, #tpu.memory_space<any>>) dst(%66 : memref<1x128xf32, #tpu.memory_space<vmem>>)
    }
    %20 = arith.index_cast %9 : i32 to index
    %c0 = arith.constant 0 : index
    %c0_11 = arith.constant 0 : index
    %c0_12 = arith.constant 0 : index
    %21 = vector.load %arg6[%20, %c0, %c0_11, %c0_12] : memref<2x8x4x128xf32, #tpu.memory_space<vmem>>, vector<1x8x4x128xf32>
    %22 = vector.shape_cast %21 : vector<1x8x4x128xf32> to vector<8x4x128xf32>
    %cst = arith.constant 11.3137083 : f32
    %23 = vector.broadcast %cst : f32 to vector<8x4x128xf32>
    %24 = arith.mulf %22, %23 : vector<8x4x128xf32>
    %c0_13 = arith.constant 0 : index
    %c0_14 = arith.constant 0 : index
    %c0_15 = arith.constant 0 : index
    %25 = vector.load %arg4[%c0_13, %c0_14, %c0_15] : memref<8x1x128xf32, #tpu.memory_space<vmem>>, vector<8x1x128xf32>
    %26 = vector.broadcast %25 : vector<8x1x128xf32> to vector<8x4x128xf32>
    %27 = arith.addf %24, %26 : vector<8x4x128xf32>
    %c0_16 = arith.constant 0 : index
    %c0_17 = arith.constant 0 : index
    %c0_18 = arith.constant 0 : index
    %28 = vector.load %arg5[%c0_16, %c0_17, %c0_18] : memref<8x4x128xf32, #tpu.memory_space<vmem>>, vector<8x4x128xf32>
    tpu.vector_store %arg5[%c0_16, %c0_17, %c0_18], %27 {strides = array<i32>} : memref<8x4x128xf32, #tpu.memory_space<vmem>>, vector<8x4x128xf32>,
    return
  }
  func.func @transform_1(%arg0: i32, %arg1: i32, %arg2: memref<128xi32, #tpu.memory_space<smem>>) -> (i32, i32, i32) {
    %c2_i32 = arith.constant 2 : i32
    %0 = arith.muli %arg0, %c2_i32 : i32
    %1 = arith.addi %0, %arg1 : i32
    %c0_i32 = arith.constant 0 : i32
    %c0_i32_0 = arith.constant 0 : i32
    %c0_i32_1 = arith.constant 0 : i32
    return %1, %c0_i32, %c0_i32_0 : i32, i32, i32
  }
  func.func @transform_2(%arg0: i32, %arg1: i32, %arg2: memref<128xi32, #tpu.memory_space<smem>>) -> (i32, i32, i32) {
    %c2_i32 = arith.constant 2 : i32
    %0 = arith.muli %arg0, %c2_i32 : i32
    %1 = arith.addi %0, %arg1 : i32
    %c0_i32 = arith.constant 0 : i32
    %c0_i32_0 = arith.constant 0 : i32
    %c0_i32_1 = arith.constant 0 : i32
    return %1, %c0_i32, %c0_i32_0 : i32, i32, i32
  }
}

</mosaic_0001>

<llo_original>
// kernel: tpu_custom_call.1
$region0: #{tpu_custom_call.1}
  #allocation0 [shape = 'u32[]', space=smem, size = 0x4, offset = 0x4, fixed_abs, tag = 'smem constant byte address 0x4 - core index']
  #allocation1 [shape = 'u32[144,128]{1,0:T(1,128)}', space=vmem, size = 0x12000, scoped, tag = 'internal scratch']
  #allocation2 [shape = 'f32[2,8,4,128]{3,2,1,0:T(4,128)}', space=vmem, size = 0x8000, scoped, tag = 'scratch operand']
  #allocation3 [shape = 's32[2]{0}', space=sflag, size = 0x8, scoped, tag = 'scratch operand']
  #allocation4 [shape = 's32[1]{0}', space=sflag, size = 0x4, scoped, tag = 'scoped memory for tpu_custom_call.1']
  #allocation5 [shape = 'u8[512]{0}', space=smem, size = 0x200, scoped, tag = 'prefetched SMEM operand 0']
  #allocation10 [shape = 's32[]', space=sflag, size = 0x4, offset = 0, fixed_abs, tag = 'sflag constant byte address 0x0 - dummy sync flag']
  #allocation11 [shape = 's32[]', space=sflag, size = 0x4, offset = 0, fixed_abs, tag = 'sflag constant byte address 0x0 - dummy sync flag']
  #allocation12 [shape = 'u32[]', space=smem, size = 0x4, offset = 0x44, fixed_abs, tag = 'smem constant byte address 0x44 - assertion arg 0']
  #allocation13 [shape = 'u32[]', space=smem, size = 0x4, offset = 0x48, fixed_abs, tag = 'smem constant byte address 0x48 - assertion arg 1']
  #allocation14 [shape = 's32[]', space=sflag, size = 0x4, offset = 0, fixed_abs, tag = 'sflag constant byte address 0x0 - dummy sync flag']
  #allocation15 [shape = 's32[]', space=sflag, size = 0x4, offset = 0, fixed_abs, tag = 'sflag constant byte address 0x0 - dummy sync flag']
  #allocation16 [shape = 's32[]', space=sflag, size = 0x4, offset = 0, fixed_abs, tag = 'sflag constant byte address 0x0 - dummy sync flag']
  #allocation17 [shape = 's32[]', space=sflag, size = 0x4, offset = 0, fixed_abs, tag = 'sflag constant byte address 0x0 - dummy sync flag']
  #allocation18 [shape = 's32[]', space=sflag, size = 0x4, offset = 0, fixed_abs, tag = 'sflag constant byte address 0x0 - dummy sync flag']
  #allocation19 [shape = 's32[]', space=sflag, size = 0x4, offset = 0, fixed_abs, tag = 'sflag constant byte address 0x0 - dummy sync flag']
  #allocation20 [shape = 's32[]', space=sflag, size = 0x4, offset = 0, fixed_abs, tag = 'sflag constant byte address 0x0 - dummy sync flag']
  #allocation21 [shape = 's32[]', space=sflag, size = 0x4, offset = 0, fixed_abs, tag = 'sflag constant byte address 0x0 - dummy sync flag']
  #allocation22 [shape = 's32[]', space=sflag, size = 0x4, offset = 0, fixed_abs, tag = 'sflag constant byte address 0x0 - dummy sync flag']
  #allocation23 [shape = 's32[]', space=sflag, size = 0x4, offset = 0, fixed_abs, tag = 'sflag constant byte address 0x0 - dummy sync flag']
  #allocation24 [shape = 's32[]', space=sflag, size = 0x4, offset = 0, fixed_abs, tag = 'sflag constant byte address 0x0 - dummy sync flag']
  #allocation25 [shape = 's32[]', space=sflag, size = 0x4, offset = 0, fixed_abs, tag = 'sflag constant byte address 0x0 - dummy sync flag']
  #allocation26 [shape = 's32[]', space=sflag, size = 0x4, offset = 0, fixed_abs, tag = 'sflag constant byte address 0x0 - dummy sync flag']
  #allocation27 [shape = 's32[]', space=sflag, size = 0x4, offset = 0, fixed_abs, tag = 'sflag constant byte address 0x0 - dummy sync flag']
  #allocation28 [shape = 's32[]', space=sflag, size = 0x4, offset = 0, fixed_abs, tag = 'sflag constant byte address 0x0 - dummy sync flag']
  #allocation29 [shape = 's32[]', space=sflag, size = 0x4, offset = 0, fixed_abs, tag = 'sflag constant byte address 0x0 - dummy sync flag']
  #allocation30 [shape = 's32[]', space=sflag, size = 0x4, offset = 0, fixed_abs, tag = 'sflag constant byte address 0x0 - dummy sync flag']
  #allocation31 [shape = 's32[]', space=sflag, size = 0x4, offset = 0, fixed_abs, tag = 'sflag constant byte address 0x0 - dummy sync flag']
  #allocation32 [shape = 's32[]', space=sflag, size = 0x4, offset = 0, fixed_abs, tag = 'sflag constant byte address 0x0 - dummy sync flag']
  #allocation33 [shape = 's32[]', space=sflag, size = 0x4, offset = 0, fixed_abs, tag = 'sflag constant byte address 0x0 - dummy sync flag']
  #allocation34 [shape = 's32[]', space=sflag, size = 0x4, offset = 0, fixed_abs, tag = 'sflag constant byte address 0x0 - dummy sync flag']
  #allocation35 [shape = 's32[]', space=sflag, size = 0x4, offset = 0, fixed_abs, tag = 'sflag constant byte address 0x0 - dummy sync flag']
  #allocation36 [shape = 's32[]', space=sflag, size = 0x4, offset = 0, fixed_abs, tag = 'sflag constant byte address 0x0 - dummy sync flag']
  #allocation37 [shape = 's32[]', space=sflag, size = 0x4, offset = 0, fixed_abs, tag = 'sflag constant byte address 0x0 - dummy sync flag']
  #allocation38 [shape = 's32[]', space=sflag, size = 0x4, offset = 0, fixed_abs, tag = 'sflag constant byte address 0x0 - dummy sync flag']
  #allocation39 [shape = 's32[]', space=sflag, size = 0x4, offset = 0, fixed_abs, tag = 'sflag constant byte address 0x0 - dummy sync flag']
  #allocation40 [shape = 's32[]', space=sflag, size = 0x4, offset = 0, fixed_abs, tag = 'sflag constant byte address 0x0 - dummy sync flag']
  #allocation41 [shape = 's32[]', space=sflag, size = 0x4, offset = 0, fixed_abs, tag = 'sflag constant byte address 0x0 - dummy sync flag']
  #allocation42 [shape = 's32[]', space=sflag, size = 0x4, offset = 0, fixed_abs, tag = 'sflag constant byte address 0x0 - dummy sync flag']
  #allocation43 [shape = 's32[]', space=sflag, size = 0x4, offset = 0, fixed_abs, tag = 'sflag constant byte address 0x0 - dummy sync flag']
  #allocation44 [shape = 's32[]', space=sflag, size = 0x4, offset = 0, fixed_abs, tag = 'sflag constant byte address 0x0 - dummy sync flag']
  #allocation45 [shape = 's32[]', space=sflag, size = 0x4, offset = 0, fixed_abs, tag = 'sflag constant byte address 0x0 - dummy sync flag']
  #allocation46 [shape = 's32[]', space=sflag, size = 0x4, offset = 0, fixed_abs, tag = 'sflag constant byte address 0x0 - dummy sync flag']
  #allocation47 [shape = 's32[]', space=sflag, size = 0x4, offset = 0, fixed_abs, tag = 'sflag constant byte address 0x0 - dummy sync flag']
  #allocation48 [shape = 's32[]', space=sflag, size = 0x4, offset = 0, fixed_abs, tag = 'sflag constant byte address 0x0 - dummy sync flag']
  #allocation49 [shape = 's32[]', space=sflag, size = 0x4, offset = 0, fixed_abs, tag = 'sflag constant byte address 0x0 - dummy sync flag']
  #allocation50 [shape = 's32[]', space=sflag, size = 0x4, offset = 0, fixed_abs, tag = 'sflag constant byte address 0x0 - dummy sync flag']
  #allocation51 [shape = 's32[]', space=sflag, size = 0x4, offset = 0, fixed_abs, tag = 'sflag constant byte address 0x0 - dummy sync flag']
  #allocation52 [shape = 's32[]', space=sflag, size = 0x4, offset = 0, fixed_abs, tag = 'sflag constant byte address 0x0 - dummy sync flag']
  #allocation53 [shape = 's32[]', space=sflag, size = 0x4, offset = 0, fixed_abs, tag = 'sflag constant byte address 0x0 - dummy sync flag']
  #allocation54 [shape = 's32[]', space=sflag, size = 0x4, offset = 0, fixed_abs, tag = 'sflag constant byte address 0x0 - dummy sync flag']
  #allocation55 [shape = 's32[]', space=sflag, size = 0x4, offset = 0, fixed_abs, tag = 'sflag constant byte address 0x0 - dummy sync flag']
  #allocation56 [shape = 's32[]', space=sflag, size = 0x4, offset = 0, fixed_abs, tag = 'sflag constant byte address 0x0 - dummy sync flag']
  #allocation57 [shape = 's32[]', space=sflag, size = 0x4, offset = 0, fixed_abs, tag = 'sflag constant byte address 0x0 - dummy sync flag']
  #allocation58 [shape = 's32[]', space=sflag, size = 0x4, offset = 0, fixed_abs, tag = 'sflag constant byte address 0x0 - dummy sync flag']
  #allocation59 [shape = 's32[]', space=sflag, size = 0x4, offset = 0, fixed_abs, tag = 'sflag constant byte address 0x0 - dummy sync flag']
  #allocation60 [shape = 's32[]', space=sflag, size = 0x4, offset = 0, fixed_abs, tag = 'sflag constant byte address 0x0 - dummy sync flag']
  #allocation61 [shape = 's32[]', space=sflag, size = 0x4, offset = 0, fixed_abs, tag = 'sflag constant byte address 0x0 - dummy sync flag']
  #allocation62 [shape = 's32[]', space=sflag, size = 0x4, offset = 0, fixed_abs, tag = 'sflag constant byte address 0x0 - dummy sync flag']
  #allocation63 [shape = 's32[]', space=sflag, size = 0x4, offset = 0, fixed_abs, tag = 'sflag constant byte address 0x0 - dummy sync flag']
  #allocation64 [shape = 's32[]', space=sflag, size = 0x4, offset = 0, fixed_abs, tag = 'sflag constant byte address 0x0 - dummy sync flag']
  #allocation65 [shape = 's32[]', space=sflag, size = 0x4, offset = 0, fixed_abs, tag = 'sflag constant byte address 0x0 - dummy sync flag']
  #allocation66 [shape = 's32[]', space=sflag, size = 0x4, offset = 0, fixed_abs, tag = 'sflag constant byte address 0x0 - dummy sync flag']
  #allocation67 [shape = 's32[]', space=sflag, size = 0x4, offset = 0, fixed_abs, tag = 'sflag constant byte address 0x0 - dummy sync flag']
  #allocation68 [shape = 's32[]', space=sflag, size = 0x4, offset = 0, fixed_abs, tag = 'sflag constant byte address 0x0 - dummy sync flag']
  #allocation69 [shape = 's32[]', space=sflag, size = 0x4, offset = 0, fixed_abs, tag = 'sflag constant byte address 0x0 - dummy sync flag']
  #allocation70 [shape = 's32[]', space=sflag, size = 0x4, offset = 0, fixed_abs, tag = 'sflag constant byte address 0x0 - dummy sync flag']
  #allocation71 [shape = 's32[]', space=sflag, size = 0x4, offset = 0, fixed_abs, tag = 'sflag constant byte address 0x0 - dummy sync flag']
  #allocation72 [shape = 's32[]', space=sflag, size = 0x4, offset = 0, fixed_abs, tag = 'sflag constant byte address 0x0 - dummy sync flag']
  #allocation73 [shape = 's32[]', space=sflag, size = 0x4, offset = 0, fixed_abs, tag = 'sflag constant byte address 0x0 - dummy sync flag']
  #allocation74 [shape = 's32[]', space=sflag, size = 0x4, offset = 0, fixed_abs, tag = 'sflag constant byte address 0x0 - dummy sync flag']
  #allocation75 [shape = 's32[]', space=sflag, size = 0x4, offset = 0, fixed_abs, tag = 'sflag constant byte address 0x0 - dummy sync flag']
  %s0 = inlined_call_operand.hbm [shape: s32[128], index: 0, kind: input, shape index: {}]
  %s1 = inlined_call_operand.hbm [shape: f32[512,128], index: 1, kind: input, shape index: {}]
  %s2 = inlined_call_operand.hbm [shape: f32[32,1,128], index: 2, kind: input, shape index: {}]
  %s3 = inlined_call_operand.hbm [shape: f32[32,4,128], index: 3, kind: output, shape index: {}]
  %s4 = sld [smem:[#allocation0]]
  $region198: #{tpu_custom_call.1} parent=0
    _
  %s6 = ssub.s32 1, %s4
  %s7 = scalar_select 0, %s6, %s4
  %9 = dma.hbm_to_smem %s0, 16, [#allocation5], [#allocation4]
  %10 = dma.done [#allocation4], 16
  %11 = sfence
  $region1: #{tpu_custom_call.1} parent=0
    #allocation6 [shape = 'u8[8192]{0}', space=vmem, size = 0x2000, scoped, tag = 'input window, operand 2']
    #allocation7 [shape = 's32[2]{0}', space=sflag, size = 0x8, scoped, tag = 'scoped memory for tpu_custom_call.1']
    #allocation8 [shape = 's32[2]{0}', space=sflag, size = 0x8, scoped, tag = 'scoped memory for tpu_custom_call.1']
    #allocation9 [shape = 'u8[32768]{0}', space=vmem, size = 0x8000, scoped, tag = 'output window, operand 0']
    %12 = vsyncpa [#allocation7], 0
    %s13 = scalar_lea.sflag [#allocation7], 1
    %14 = vsyncpa %s13, 0
    %15 = vsyncpa [#allocation8], 0
    %s16 = scalar_lea.sflag [#allocation8], 1
    %17 = vsyncpa %s16, 0
    loop: start=0, step=1, limit=6
    $region2: #{tpu_custom_call.1} parent=1 // loop_pre_header
      _
    $region3: #{tpu_custom_call.1} parent=1 // loop_header
      %s19 = sphi 0, %s23
      %p20 = scmp.ge.s32.totalorder %s19, 6
      %s26 = sphi 0, %s38
      %s27 = sphi 0, %s34
      %s28 = sphi 0, %s26
      %s29 = sphi 0, %s27
      %s30 = sphi 0, %s28
      %s31 = sphi 0, %s29
      %s45 = sphi 0, %s47
      %s48 = sphi 0, %s45
      %s49 = sphi 0, %s48
      %s65 = sphi 0, %s49
      %s75 = sphi 0, %s77
      %s78 = sphi 0, %s75
      %s79 = sphi 0, %s78
      %s95 = sphi 0, %s79
    $region4: #{tpu_custom_call.1} parent=1 // loop_header_branch
      %22 = sbr.rel (%p20) target = $region8
    $region5: #{tpu_custom_call.1} parent=1 // loop_body
      %s24 = ssub.s32 %s19, 1
      %s25 = ssub.s32 %s19, 2
      %s32 = sadd.s32 1, %s27
      %p33 = scmp.ge.s32.totalorder %s32, 2
      %s34 = scalar_select %p33, 0, %s32
      %s35 = sadd.s32 1, %s26
      %s36 = scalar_select %p33, %s35, %s26
      %p37 = scmp.ge.s32.totalorder %s36, 2
      %s38 = scalar_select %p37, 0, %s36
      %s39 = smul.u32 %s26, 2
      %s40 = sadd.s32 %s39, %s27
      %s41 = smul.u32 %s38, 2
      %s42 = sadd.s32 %s41, %s34
      %s43 = ssub.s32 %s40, %s42
      %p44 = scmp.eq.s32.totalorder %s43, 0
      %s46 = sadd.s32 %s45, 1
      %s47 = scalar_select %p44, %s45, %s46
      %p50 = pneg %p44
      %p51 = scmp.eq.s32.totalorder %s19, 3
      %p52 = por %p50, %p51
      %p53 = scmp.ne.s32.totalorder %s45, %s48
      %p54 = scmp.eq.s32.totalorder %s19, 0
      %p55 = por %p53, %p54
      %p56 = scmp.ne.s32.totalorder %s45, %s48
      %p57 = scmp.eq.s32.totalorder %s24, 3
      %p58 = por %p56, %p57
      %p59 = scmp.ne.s32.totalorder %s48, %s49
      %p60 = scmp.eq.s32.totalorder %s24, 0
      %p61 = por %p59, %p60
      %p62 = scmp.ne.s32.totalorder %s48, %s49
      %p63 = scmp.eq.s32.totalorder %s25, 3
      %p64 = por %p62, %p63
      %p66 = scmp.ne.s32.totalorder %s49, %s65
      %p67 = scmp.eq.s32.totalorder %s25, 0
      %p68 = por %p66, %p67
      %s69 = smul.u32 %s26, 2
      %s70 = sadd.s32 %s69, %s27
      %s71 = smul.u32 %s38, 2
      %s72 = sadd.s32 %s71, %s34
      %s73 = ssub.s32 %s70, %s72
      %p74 = scmp.eq.s32.totalorder %s73, 0
      %s76 = sadd.s32 %s75, 1
      %s77 = scalar_select %p74, %s75, %s76
      %p80 = pneg %p74
      %p81 = scmp.eq.s32.totalorder %s19, 3
      %p82 = por %p80, %p81
      %p83 = scmp.ne.s32.totalorder %s75, %s78
      %p84 = scmp.eq.s32.totalorder %s19, 0
      %p85 = por %p83, %p84
      %p86 = scmp.ne.s32.totalorder %s75, %s78
      %p87 = scmp.eq.s32.totalorder %s24, 3
      %p88 = por %p86, %p87
      %p89 = scmp.ne.s32.totalorder %s78, %s79
      %p90 = scmp.eq.s32.totalorder %s24, 0
      %p91 = por %p89, %p90
      %p92 = scmp.ne.s32.totalorder %s78, %s79
      %p93 = scmp.eq.s32.totalorder %s25, 3
      %p94 = por %p92, %p93
      %p96 = scmp.ne.s32.totalorder %s79, %s95
      %p97 = scmp.eq.s32.totalorder %s25, 0
      %p98 = por %p96, %p97
      %p99 = scmp.le.s32.totalorder 1, %s19
      %p100 = scmp.lt.s32.totalorder %s19, 5
      %p101 = pnand %p99, %p100
      %p102 = pneg %p101
      // Predicated region
      $region9: #{tpu_custom_call.1} parent=5 // pred_check
        _
      $region10: #{tpu_custom_call.1} parent=5 // pred_check_branch
        %104 = sbr.rel (%p101) target = $region12
      $region11: #{tpu_custom_call.1} parent=5 // pred_region
        %s105 = ssub.s32 %s19, 1
      $region12: #{tpu_custom_call.1} parent=5 // pred_fallthru
        _
      %p106 = scmp.lt.s32.totalorder %s19, 4
      // Predicated region
      $region13: #{tpu_custom_call.1} parent=5 // pred_check
        %p107 = pneg %p106
      $region14: #{tpu_custom_call.1} parent=5 // pred_check_branch
        %109 = sbr.rel (%p107) target = $region16
      $region15: #{tpu_custom_call.1} parent=5 // pred_region
        // Predicated region
        $region17: #{tpu_custom_call.1} parent=15 // pred_check
          %p110 = pneg %p55
        $region18: #{tpu_custom_call.1} parent=15 // pred_check_branch
          %112 = sbr.rel (%p110) target = $region20
        $region19: #{tpu_custom_call.1} parent=15 // pred_region
          %s113 = sand.u32 %s45, 1
          %s114 = scalar_lea.sflag [#allocation7], %s113
          %s115 = sand.u32 %s45, 1
          %s116 = smul.addr %s115, 8
          %s117 = scalar_lea.vmem [#allocation6], %s116
          %s118 = smul.u32 %s26, 2
          %s119 = sadd.s32 %s118, %s27
          %s120 = smul.u32 8, %s119
          %s122 = ssub.s32 128, 128
          %123 = vsyncadd %s114, %s122
          %s124 = smul.addr %s120, 16
          %s125 = scalar_lea.hbm %s2, %s124
          %s126 = sshll.u32 %s117, 4
          %s127 = int_to_ptr.vmem [resolvable:$true] %s126
          %132 = dma.hbm_to_vmem [thread:$0]  %s125, 128, %s127, %s114, 16, 16, 1
        $region20: #{tpu_custom_call.1} parent=15 // pred_fallthru
          _
      $region16: #{tpu_custom_call.1} parent=5 // pred_fallthru
        _
      %p133 = scmp.le.s32.totalorder 1, %s19
      %p134 = scmp.lt.s32.totalorder %s19, 5
      %p135 = pnand %p133, %p134
      %p136 = pneg %p135
      // Predicated region
      $region21: #{tpu_custom_call.1} parent=5 // pred_check
        _
      $region22: #{tpu_custom_call.1} parent=5 // pred_check_branch
        %138 = sbr.rel (%p135) target = $region24
      $region23: #{tpu_custom_call.1} parent=5 // pred_region
        %s139 = ssub.s32 %s19, 1
        %s140 = sand.u32 %s48, 1
        %s141 = scalar_lea.sflag [#allocation7], %s140
        %s142 = sand.u32 %s48, 1
        %s143 = smul.addr %s142, 8
        %s144 = scalar_lea.vmem [#allocation6], %s143
        // Predicated region
        $region25: #{tpu_custom_call.1} parent=23 // pred_check
          %p145 = pneg %p61
        $region26: #{tpu_custom_call.1} parent=23 // pred_check_branch
          %147 = sbr.rel (%p145) target = $region28
        $region27: #{tpu_custom_call.1} parent=23 // pred_region
          %148 = dma.done %s141, 128
        $region28: #{tpu_custom_call.1} parent=23 // pred_fallthru
          _
        %s149 = sand.u32 %s48, 1
        %s150 = scalar_lea.sflag [#allocation7], %s149
        %s151 = sand.u32 %s48, 1
        %s152 = smul.addr %s151, 8
        %s153 = scalar_lea.vmem [#allocation6], %s152
        %p154 = pneg %p61
        %p155 = pneg %p58
        %p156 = pneg %p91
        %p157 = pneg %p88
        %s158 = sand.u32 %s78, 1
        %s159 = scalar_lea.sflag [#allocation8], %s158
        %s160 = sand.u32 %s78, 1
        %s161 = smul.addr %s160, 32
        %s162 = scalar_lea.vmem [#allocation9], %s161
        %s163 = smul.u32 %s28, 2
        %s164 = sadd.s32 %s163, %s29
        %s165 = smul.u32 8, %s164
        %s166 = smul.u32 %s28, 2
        %s167 = sadd.s32 %s166, %s29
        %s168 = smul.u32 8, %s167
        %p169 = scmp.lt.s32.totalorder %s29, 0
        %s170 = ssub.s32 0, %s29
        %s171 = scalar_select %p169, %s170, %s29
        %s172 = sand.u32 %s171, 1
        %s173 = ssub.s32 0, %s172
        %s174 = scalar_select %p169, %s173, %s172
        %p175 = scmp.ne.s32.totalorder %s174, 0
        %p176 = scmp.lt.s32.totalorder %s174, 0
        %p177 = pnand %p176, %p175
        %p178 = pneg %p177
        %s179 = sadd.s32 %s174, 2
        %s180 = scalar_select %p178, %s179, %s174
        %s181 = smul.u32 %s28, 2
        %s182 = sadd.s32 %s181, %s29
        %p183 = scmp.eq.s32.totalorder %s29, 0
        // Predicated region
        $region29: #{tpu_custom_call.1} parent=23 // pred_check
          %p184 = pneg %p183
        $region30: #{tpu_custom_call.1} parent=23 // pred_check_branch
          %186 = sbr.rel (%p184) target = $region32
        $region31: #{tpu_custom_call.1} parent=23 // pred_region
          %s187 = smul.u32 %s182, 32
          loop: start=0, step=1, limit=2
          $region33: #{tpu_custom_call.1} parent=31 // loop_pre_header
            _
          $region34: #{tpu_custom_call.1} parent=31 // loop_header
            %s189 = sphi 0, %s193
            %p190 = scmp.ge.s32.totalorder %s189, 2
          $region35: #{tpu_custom_call.1} parent=31 // loop_header_branch
            %192 = sbr.rel (%p190) target = $region39
          $region36: #{tpu_custom_call.1} parent=31 // loop_body
            %s194 = smul.u32 %s189, 4
            %s195 = smul.u32 %s189, 16
            %s196 = sadd.s32 %s187, %s195
            %s197 = sld [smem:[#allocation5 + %s196]]
            %s198 = smul.addr %s197, 16
            %s199 = scalar_lea.hbm %s1, %s198
            %s200 = smul.u32 %s194, 4
            %s201 = smul.u32 %s180, 32
            %s202 = sadd.s32 %s200, %s201
            %s203 = scalar_lea.vmem [#allocation2], %s202
            %s204 = scalar_lea.sflag [#allocation3], %s180
            // Predicated region
            $region40: #{tpu_custom_call.1} parent=36 // pred_check
              _
            $region41: #{tpu_custom_call.1} parent=36 // pred_check_branch
              %206 = sbr.rel target = $region43
            $region42: #{tpu_custom_call.1} parent=36 // pred_region
              %207 = sst [smem:[#allocation12]] [#allocation11]
              %208 = sst [smem:[#allocation13]] [#allocation10]
            $region43: #{tpu_custom_call.1} parent=36 // pred_fallthru
              _
            %210 = shalt.err (0)
            %s212 = sshll.u32 %s203, 4
            %s213 = int_to_ptr.vmem [resolvable:$true] %s212
            %215 = dma.hbm_to_vmem [thread:$0]  %s199, 16, %s213, %s204
            %s216 = sadd.s32 %s196, 1
            %s217 = sld [smem:[#allocation5 + %s216]]
            %s218 = smul.addr %s217, 16
            %s219 = scalar_lea.hbm %s1, %s218
            %s220 = sadd.s32 1, %s200
            %s221 = sadd.s32 %s220, %s201
            %s222 = scalar_lea.vmem [#allocation2], %s221
            // Predicated region
            $region44: #{tpu_custom_call.1} parent=36 // pred_check
              _
            $region45: #{tpu_custom_call.1} parent=36 // pred_check_branch
              %224 = sbr.rel target = $region47
            $region46: #{tpu_custom_call.1} parent=36 // pred_region
              %225 = sst [smem:[#allocation12]] [#allocation15]
              %226 = sst [smem:[#allocation13]] [#allocation14]
            $region47: #{tpu_custom_call.1} parent=36 // pred_fallthru
              _
            %228 = shalt.err (0)
            %s230 = sshll.u32 %s222, 4
            %s231 = int_to_ptr.vmem [resolvable:$true] %s230
            %233 = dma.hbm_to_vmem [thread:$0]  %s219, 16, %s231, %s204
            %s234 = sadd.s32 %s196, 2
            %s235 = sld [smem:[#allocation5 + %s234]]
            %s236 = smul.addr %s235, 16
            %s237 = scalar_lea.hbm %s1, %s236
            %s238 = sadd.s32 2, %s200
            %s239 = sadd.s32 %s238, %s201
            %s240 = scalar_lea.vmem [#allocation2], %s239
            // Predicated region
            $region48: #{tpu_custom_call.1} parent=36 // pred_check
              _
            $region49: #{tpu_custom_call.1} parent=36 // pred_check_branch
              %242 = sbr.rel target = $region51
            $region50: #{tpu_custom_call.1} parent=36 // pred_region
              %243 = sst [smem:[#allocation12]] [#allocation17]
              %244 = sst [smem:[#allocation13]] [#allocation16]
            $region51: #{tpu_custom_call.1} parent=36 // pred_fallthru
              _
            %246 = shalt.err (0)
            %s248 = sshll.u32 %s240, 4
            %s249 = int_to_ptr.vmem [resolvable:$true] %s248
            %251 = dma.hbm_to_vmem [thread:$0]  %s237, 16, %s249, %s204
            %s252 = sadd.s32 %s196, 3
            %s253 = sld [smem:[#allocation5 + %s252]]
            %s254 = smul.addr %s253, 16
            %s255 = scalar_lea.hbm %s1, %s254
            %s256 = sadd.s32 3, %s200
            %s257 = sadd.s32 %s256, %s201
            %s258 = scalar_lea.vmem [#allocation2], %s257
            // Predicated region
            $region52: #{tpu_custom_call.1} parent=36 // pred_check
              _
            $region53: #{tpu_custom_call.1} parent=36 // pred_check_branch
              %260 = sbr.rel target = $region55
            $region54: #{tpu_custom_call.1} parent=36 // pred_region
              %261 = sst [smem:[#allocation12]] [#allocation19]
              %262 = sst [smem:[#allocation13]] [#allocation18]
            $region55: #{tpu_custom_call.1} parent=36 // pred_fallthru
              _
            %264 = shalt.err (0)
            %s266 = sshll.u32 %s258, 4
            %s267 = int_to_ptr.vmem [resolvable:$true] %s266
            %269 = dma.hbm_to_vmem [thread:$0]  %s255, 16, %s267, %s204
            %s270 = sadd.s32 %s194, 1
            %s271 = smul.u32 %s270, 4
            %s272 = sadd.s32 %s187, %s271
            %s273 = sld [smem:[#allocation5 + %s272]]
            %s274 = smul.addr %s273, 16
            %s275 = scalar_lea.hbm %s1, %s274
            %s276 = sadd.s32 %s271, %s201
            %s277 = scalar_lea.vmem [#allocation2], %s276
            // Predicated region
            $region56: #{tpu_custom_call.1} parent=36 // pred_check
              _
            $region57: #{tpu_custom_call.1} parent=36 // pred_check_branch
              %279 = sbr.rel target = $region59
            $region58: #{tpu_custom_call.1} parent=36 // pred_region
              %280 = sst [smem:[#allocation12]] [#allocation21]
              %281 = sst [smem:[#allocation13]] [#allocation20]
            $region59: #{tpu_custom_call.1} parent=36 // pred_fallthru
              _
            %283 = shalt.err (0)
            %s285 = sshll.u32 %s277, 4
            %s286 = int_to_ptr.vmem [resolvable:$true] %s285
            %288 = dma.hbm_to_vmem [thread:$0]  %s275, 16, %s286, %s204
            %s289 = sadd.s32 %s272, 1
            %s290 = sld [smem:[#allocation5 + %s289]]
            %s291 = smul.addr %s290, 16
            %s292 = scalar_lea.hbm %s1, %s291
            %s293 = sadd.s32 1, %s271
            %s294 = sadd.s32 %s293, %s201
            %s295 = scalar_lea.vmem [#allocation2], %s294
            // Predicated region
            $region60: #{tpu_custom_call.1} parent=36 // pred_check
              _
            $region61: #{tpu_custom_call.1} parent=36 // pred_check_branch
              %297 = sbr.rel target = $region63
            $region62: #{tpu_custom_call.1} parent=36 // pred_region
              %298 = sst [smem:[#allocation12]] [#allocation23]
              %299 = sst [smem:[#allocation13]] [#allocation22]
            $region63: #{tpu_custom_call.1} parent=36 // pred_fallthru
              _
            %301 = shalt.err (0)
            %s303 = sshll.u32 %s295, 4
            %s304 = int_to_ptr.vmem [resolvable:$true] %s303
            %306 = dma.hbm_to_vmem [thread:$0]  %s292, 16, %s304, %s204
            %s307 = sadd.s32 %s272, 2
            %s308 = sld [smem:[#allocation5 + %s307]]
            %s309 = smul.addr %s308, 16
            %s310 = scalar_lea.hbm %s1, %s309
            %s311 = sadd.s32 2, %s271
            %s312 = sadd.s32 %s311, %s201
            %s313 = scalar_lea.vmem [#allocation2], %s312
            // Predicated region
            $region64: #{tpu_custom_call.1} parent=36 // pred_check
              _
            $region65: #{tpu_custom_call.1} parent=36 // pred_check_branch
              %315 = sbr.rel target = $region67
            $region66: #{tpu_custom_call.1} parent=36 // pred_region
              %316 = sst [smem:[#allocation12]] [#allocation25]
              %317 = sst [smem:[#allocation13]] [#allocation24]
            $region67: #{tpu_custom_call.1} parent=36 // pred_fallthru
              _
            %319 = shalt.err (0)
            %s321 = sshll.u32 %s313, 4
            %s322 = int_to_ptr.vmem [resolvable:$true] %s321
            %324 = dma.hbm_to_vmem [thread:$0]  %s310, 16, %s322, %s204
            %s325 = sadd.s32 %s272, 3
            %s326 = sld [smem:[#allocation5 + %s325]]
            %s327 = smul.addr %s326, 16
            %s328 = scalar_lea.hbm %s1, %s327
            %s329 = sadd.s32 3, %s271
            %s330 = sadd.s32 %s329, %s201
            %s331 = scalar_lea.vmem [#allocation2], %s330
            // Predicated region
            $region68: #{tpu_custom_call.1} parent=36 // pred_check
              _
            $region69: #{tpu_custom_call.1} parent=36 // pred_check_branch
              %333 = sbr.rel target = $region71
            $region70: #{tpu_custom_call.1} parent=36 // pred_region
              %334 = sst [smem:[#allocation12]] [#allocation27]
              %335 = sst [smem:[#allocation13]] [#allocation26]
            $region71: #{tpu_custom_call.1} parent=36 // pred_fallthru
              _
            %337 = shalt.err (0)
            %s339 = sshll.u32 %s331, 4
            %s340 = int_to_ptr.vmem [resolvable:$true] %s339
            %342 = dma.hbm_to_vmem [thread:$0]  %s328, 16, %s340, %s204
            %s343 = sadd.s32 %s194, 2
            %s344 = smul.u32 %s343, 4
            %s345 = sadd.s32 %s187, %s344
            %s346 = sld [smem:[#allocation5 + %s345]]
            %s347 = smul.addr %s346, 16
            %s348 = scalar_lea.hbm %s1, %s347
            %s349 = sadd.s32 %s344, %s201
            %s350 = scalar_lea.vmem [#allocation2], %s349
            // Predicated region
            $region72: #{tpu_custom_call.1} parent=36 // pred_check
              _
            $region73: #{tpu_custom_call.1} parent=36 // pred_check_branch
              %352 = sbr.rel target = $region75
            $region74: #{tpu_custom_call.1} parent=36 // pred_region
              %353 = sst [smem:[#allocation12]] [#allocation29]
              %354 = sst [smem:[#allocation13]] [#allocation28]
            $region75: #{tpu_custom_call.1} parent=36 // pred_fallthru
              _
            %356 = shalt.err (0)
            %s358 = sshll.u32 %s350, 4
            %s359 = int_to_ptr.vmem [resolvable:$true] %s358
            %361 = dma.hbm_to_vmem [thread:$0]  %s348, 16, %s359, %s204
            %s362 = sadd.s32 %s345, 1
            %s363 = sld [smem:[#allocation5 + %s362]]
            %s364 = smul.addr %s363, 16
            %s365 = scalar_lea.hbm %s1, %s364
            %s366 = sadd.s32 1, %s344
            %s367 = sadd.s32 %s366, %s201
            %s368 = scalar_lea.vmem [#allocation2], %s367
            // Predicated region
            $region76: #{tpu_custom_call.1} parent=36 // pred_check
              _
            $region77: #{tpu_custom_call.1} parent=36 // pred_check_branch
              %370 = sbr.rel target = $region79
            $region78: #{tpu_custom_call.1} parent=36 // pred_region
              %371 = sst [smem:[#allocation12]] [#allocation31]
              %372 = sst [smem:[#allocation13]] [#allocation30]
            $region79: #{tpu_custom_call.1} parent=36 // pred_fallthru
              _
            %374 = shalt.err (0)
            %s376 = sshll.u32 %s368, 4
            %s377 = int_to_ptr.vmem [resolvable:$true] %s376
            %379 = dma.hbm_to_vmem [thread:$0]  %s365, 16, %s377, %s204
            %s380 = sadd.s32 %s345, 2
            %s381 = sld [smem:[#allocation5 + %s380]]
            %s382 = smul.addr %s381, 16
            %s383 = scalar_lea.hbm %s1, %s382
            %s384 = sadd.s32 2, %s344
            %s385 = sadd.s32 %s384, %s201
            %s386 = scalar_lea.vmem [#allocation2], %s385
            // Predicated region
            $region80: #{tpu_custom_call.1} parent=36 // pred_check
              _
            $region81: #{tpu_custom_call.1} parent=36 // pred_check_branch
              %388 = sbr.rel target = $region83
            $region82: #{tpu_custom_call.1} parent=36 // pred_region
              %389 = sst [smem:[#allocation12]] [#allocation33]
              %390 = sst [smem:[#allocation13]] [#allocation32]
            $region83: #{tpu_custom_call.1} parent=36 // pred_fallthru
              _
            %392 = shalt.err (0)
            %s394 = sshll.u32 %s386, 4
            %s395 = int_to_ptr.vmem [resolvable:$true] %s394
            %397 = dma.hbm_to_vmem [thread:$0]  %s383, 16, %s395, %s204
            %s398 = sadd.s32 %s345, 3
            %s399 = sld [smem:[#allocation5 + %s398]]
            %s400 = smul.addr %s399, 16
            %s401 = scalar_lea.hbm %s1, %s400
            %s402 = sadd.s32 3, %s344
            %s403 = sadd.s32 %s402, %s201
            %s404 = scalar_lea.vmem [#allocation2], %s403
            // Predicated region
            $region84: #{tpu_custom_call.1} parent=36 // pred_check
              _
            $region85: #{tpu_custom_call.1} parent=36 // pred_check_branch
              %406 = sbr.rel target = $region87
            $region86: #{tpu_custom_call.1} parent=36 // pred_region
              %407 = sst [smem:[#allocation12]] [#allocation35]
              %408 = sst [smem:[#allocation13]] [#allocation34]
            $region87: #{tpu_custom_call.1} parent=36 // pred_fallthru
              _
            %410 = shalt.err (0)
            %s412 = sshll.u32 %s404, 4
            %s413 = int_to_ptr.vmem [resolvable:$true] %s412
            %415 = dma.hbm_to_vmem [thread:$0]  %s401, 16, %s413, %s204
            %s416 = sadd.s32 %s194, 3
            %s417 = smul.u32 %s416, 4
            %s418 = sadd.s32 %s187, %s417
            %s419 = sld [smem:[#allocation5 + %s418]]
            %s420 = smul.addr %s419, 16
            %s421 = scalar_lea.hbm %s1, %s420
            %s422 = sadd.s32 %s417, %s201
            %s423 = scalar_lea.vmem [#allocation2], %s422
            // Predicated region
            $region88: #{tpu_custom_call.1} parent=36 // pred_check
              _
            $region89: #{tpu_custom_call.1} parent=36 // pred_check_branch
              %425 = sbr.rel target = $region91
            $region90: #{tpu_custom_call.1} parent=36 // pred_region
              %426 = sst [smem:[#allocation12]] [#allocation37]
              %427 = sst [smem:[#allocation13]] [#allocation36]
            $region91: #{tpu_custom_call.1} parent=36 // pred_fallthru
              _
            %429 = shalt.err (0)
            %s431 = sshll.u32 %s423, 4
            %s432 = int_to_ptr.vmem [resolvable:$true] %s431
            %434 = dma.hbm_to_vmem [thread:$0]  %s421, 16, %s432, %s204
            %s435 = sadd.s32 %s418, 1
            %s436 = sld [smem:[#allocation5 + %s435]]
            %s437 = smul.addr %s436, 16
            %s438 = scalar_lea.hbm %s1, %s437
            %s439 = sadd.s32 1, %s417
            %s440 = sadd.s32 %s439, %s201
            %s441 = scalar_lea.vmem [#allocation2], %s440
            // Predicated region
            $region92: #{tpu_custom_call.1} parent=36 // pred_check
              _
            $region93: #{tpu_custom_call.1} parent=36 // pred_check_branch
              %443 = sbr.rel target = $region95
            $region94: #{tpu_custom_call.1} parent=36 // pred_region
              %444 = sst [smem:[#allocation12]] [#allocation39]
              %445 = sst [smem:[#allocation13]] [#allocation38]
            $region95: #{tpu_custom_call.1} parent=36 // pred_fallthru
              _
            %447 = shalt.err (0)
            %s449 = sshll.u32 %s441, 4
            %s450 = int_to_ptr.vmem [resolvable:$true] %s449
            %452 = dma.hbm_to_vmem [thread:$0]  %s438, 16, %s450, %s204
            %s453 = sadd.s32 %s418, 2
            %s454 = sld [smem:[#allocation5 + %s453]]
            %s455 = smul.addr %s454, 16
            %s456 = scalar_lea.hbm %s1, %s455
            %s457 = sadd.s32 2, %s417
            %s458 = sadd.s32 %s457, %s201
            %s459 = scalar_lea.vmem [#allocation2], %s458
            // Predicated region
            $region96: #{tpu_custom_call.1} parent=36 // pred_check
              _
            $region97: #{tpu_custom_call.1} parent=36 // pred_check_branch
              %461 = sbr.rel target = $region99
            $region98: #{tpu_custom_call.1} parent=36 // pred_region
              %462 = sst [smem:[#allocation12]] [#allocation41]
              %463 = sst [smem:[#allocation13]] [#allocation40]
            $region99: #{tpu_custom_call.1} parent=36 // pred_fallthru
              _
            %465 = shalt.err (0)
            %s467 = sshll.u32 %s459, 4
            %s468 = int_to_ptr.vmem [resolvable:$true] %s467
            %470 = dma.hbm_to_vmem [thread:$0]  %s456, 16, %s468, %s204
            %s471 = sadd.s32 %s418, 3
            %s472 = sld [smem:[#allocation5 + %s471]]
            %s473 = smul.addr %s472, 16
            %s474 = scalar_lea.hbm %s1, %s473
            %s475 = sadd.s32 3, %s417
            %s476 = sadd.s32 %s475, %s201
            %s477 = scalar_lea.vmem [#allocation2], %s476
            // Predicated region
            $region100: #{tpu_custom_call.1} parent=36 // pred_check
              _
            $region101: #{tpu_custom_call.1} parent=36 // pred_check_branch
              %479 = sbr.rel target = $region103
            $region102: #{tpu_custom_call.1} parent=36 // pred_region
              %480 = sst [smem:[#allocation12]] [#allocation43]
              %481 = sst [smem:[#allocation13]] [#allocation42]
            $region103: #{tpu_custom_call.1} parent=36 // pred_fallthru
              _
            %483 = shalt.err (0)
            %s485 = sshll.u32 %s477, 4
            %s486 = int_to_ptr.vmem [resolvable:$true] %s485
            %488 = dma.hbm_to_vmem [thread:$0]  %s474, 16, %s486, %s204
          $region37: #{tpu_custom_call.1} parent=31 // loop_footer
            %s193 = sadd.s32 1, %s189
          $region38: #{tpu_custom_call.1} parent=31 // loop_footer_branch
            %188 = sbr.rel target = $region34
          $region39: #{tpu_custom_call.1} parent=31 // loop_exit
            _
        $region32: #{tpu_custom_call.1} parent=23 // pred_fallthru
          _
        %s489 = sadd.s32 %s29, 1
        %p490 = scmp.lt.s32.totalorder %s489, 2
        // Predicated region
        $region104: #{tpu_custom_call.1} parent=23 // pred_check
          %p491 = pneg %p490
        $region105: #{tpu_custom_call.1} parent=23 // pred_check_branch
          %493 = sbr.rel (%p491) target = $region107
        $region106: #{tpu_custom_call.1} parent=23 // pred_region
          %s494 = sadd.s32 %s182, 1
          %s495 = ssub.s32 1, %s180
          %s496 = smul.u32 %s494, 32
          loop: start=0, step=1, limit=2
          $region108: #{tpu_custom_call.1} parent=106 // loop_pre_header
            _
          $region109: #{tpu_custom_call.1} parent=106 // loop_header
            %s498 = sphi 0, %s502
            %p499 = scmp.ge.s32.totalorder %s498, 2
          $region110: #{tpu_custom_call.1} parent=106 // loop_header_branch
            %501 = sbr.rel (%p499) target = $region114
          $region111: #{tpu_custom_call.1} parent=106 // loop_body
            %s503 = smul.u32 %s498, 4
            %s504 = smul.u32 %s498, 16
            %s505 = sadd.s32 %s496, %s504
            %s506 = sld [smem:[#allocation5 + %s505]]
            %s507 = smul.addr %s506, 16
            %s508 = scalar_lea.hbm %s1, %s507
            %s509 = smul.u32 %s503, 4
            %s510 = smul.u32 %s495, 32
            %s511 = sadd.s32 %s509, %s510
            %s512 = scalar_lea.vmem [#allocation2], %s511
            %s513 = scalar_lea.sflag [#allocation3], %s495
            // Predicated region
            $region115: #{tpu_custom_call.1} parent=111 // pred_check
              _
            $region116: #{tpu_custom_call.1} parent=111 // pred_check_branch
              %515 = sbr.rel target = $region118
            $region117: #{tpu_custom_call.1} parent=111 // pred_region
              %516 = sst [smem:[#allocation12]] [#allocation45]
              %517 = sst [smem:[#allocation13]] [#allocation44]
            $region118: #{tpu_custom_call.1} parent=111 // pred_fallthru
              _
            %519 = shalt.err (0)
            %s521 = sshll.u32 %s512, 4
            %s522 = int_to_ptr.vmem [resolvable:$true] %s521
            %524 = dma.hbm_to_vmem [thread:$0]  %s508, 16, %s522, %s513
            %s525 = sadd.s32 %s505, 1
            %s526 = sld [smem:[#allocation5 + %s525]]
            %s527 = smul.addr %s526, 16
            %s528 = scalar_lea.hbm %s1, %s527
            %s529 = sadd.s32 1, %s509
            %s530 = sadd.s32 %s529, %s510
            %s531 = scalar_lea.vmem [#allocation2], %s530
            // Predicated region
            $region119: #{tpu_custom_call.1} parent=111 // pred_check
              _
            $region120: #{tpu_custom_call.1} parent=111 // pred_check_branch
              %533 = sbr.rel target = $region122
            $region121: #{tpu_custom_call.1} parent=111 // pred_region
              %534 = sst [smem:[#allocation12]] [#allocation47]
              %535 = sst [smem:[#allocation13]] [#allocation46]
            $region122: #{tpu_custom_call.1} parent=111 // pred_fallthru
              _
            %537 = shalt.err (0)
            %s539 = sshll.u32 %s531, 4
            %s540 = int_to_ptr.vmem [resolvable:$true] %s539
            %542 = dma.hbm_to_vmem [thread:$0]  %s528, 16, %s540, %s513
            %s543 = sadd.s32 %s505, 2
            %s544 = sld [smem:[#allocation5 + %s543]]
            %s545 = smul.addr %s544, 16
            %s546 = scalar_lea.hbm %s1, %s545
            %s547 = sadd.s32 2, %s509
            %s548 = sadd.s32 %s547, %s510
            %s549 = scalar_lea.vmem [#allocation2], %s548
            // Predicated region
            $region123: #{tpu_custom_call.1} parent=111 // pred_check
              _
            $region124: #{tpu_custom_call.1} parent=111 // pred_check_branch
              %551 = sbr.rel target = $region126
            $region125: #{tpu_custom_call.1} parent=111 // pred_region
              %552 = sst [smem:[#allocation12]] [#allocation49]
              %553 = sst [smem:[#allocation13]] [#allocation48]
            $region126: #{tpu_custom_call.1} parent=111 // pred_fallthru
              _
            %555 = shalt.err (0)
            %s557 = sshll.u32 %s549, 4
            %s558 = int_to_ptr.vmem [resolvable:$true] %s557
            %560 = dma.hbm_to_vmem [thread:$0]  %s546, 16, %s558, %s513
            %s561 = sadd.s32 %s505, 3
            %s562 = sld [smem:[#allocation5 + %s561]]
            %s563 = smul.addr %s562, 16
            %s564 = scalar_lea.hbm %s1, %s563
            %s565 = sadd.s32 3, %s509
            %s566 = sadd.s32 %s565, %s510
            %s567 = scalar_lea.vmem [#allocation2], %s566
            // Predicated region
            $region127: #{tpu_custom_call.1} parent=111 // pred_check
              _
            $region128: #{tpu_custom_call.1} parent=111 // pred_check_branch
              %569 = sbr.rel target = $region130
            $region129: #{tpu_custom_call.1} parent=111 // pred_region
              %570 = sst [smem:[#allocation12]] [#allocation51]
              %571 = sst [smem:[#allocation13]] [#allocation50]
            $region130: #{tpu_custom_call.1} parent=111 // pred_fallthru
              _
            %573 = shalt.err (0)
            %s575 = sshll.u32 %s567, 4
            %s576 = int_to_ptr.vmem [resolvable:$true] %s575
            %578 = dma.hbm_to_vmem [thread:$0]  %s564, 16, %s576, %s513
            %s579 = sadd.s32 %s503, 1
            %s580 = smul.u32 %s579, 4
            %s581 = sadd.s32 %s496, %s580
            %s582 = sld [smem:[#allocation5 + %s581]]
            %s583 = smul.addr %s582, 16
            %s584 = scalar_lea.hbm %s1, %s583
            %s585 = sadd.s32 %s580, %s510
            %s586 = scalar_lea.vmem [#allocation2], %s585
            // Predicated region
            $region131: #{tpu_custom_call.1} parent=111 // pred_check
              _
            $region132: #{tpu_custom_call.1} parent=111 // pred_check_branch
              %588 = sbr.rel target = $region134
            $region133: #{tpu_custom_call.1} parent=111 // pred_region
              %589 = sst [smem:[#allocation12]] [#allocation53]
              %590 = sst [smem:[#allocation13]] [#allocation52]
            $region134: #{tpu_custom_call.1} parent=111 // pred_fallthru
              _
            %592 = shalt.err (0)
            %s594 = sshll.u32 %s586, 4
            %s595 = int_to_ptr.vmem [resolvable:$true] %s594
            %597 = dma.hbm_to_vmem [thread:$0]  %s584, 16, %s595, %s513
            %s598 = sadd.s32 %s581, 1
            %s599 = sld [smem:[#allocation5 + %s598]]
            %s600 = smul.addr %s599, 16
            %s601 = scalar_lea.hbm %s1, %s600
            %s602 = sadd.s32 1, %s580
            %s603 = sadd.s32 %s602, %s510
            %s604 = scalar_lea.vmem [#allocation2], %s603
            // Predicated region
            $region135: #{tpu_custom_call.1} parent=111 // pred_check
              _
            $region136: #{tpu_custom_call.1} parent=111 // pred_check_branch
              %606 = sbr.rel target = $region138
            $region137: #{tpu_custom_call.1} parent=111 // pred_region
              %607 = sst [smem:[#allocation12]] [#allocation55]
              %608 = sst [smem:[#allocation13]] [#allocation54]
            $region138: #{tpu_custom_call.1} parent=111 // pred_fallthru
              _
            %610 = shalt.err (0)
            %s612 = sshll.u32 %s604, 4
            %s613 = int_to_ptr.vmem [resolvable:$true] %s612
            %615 = dma.hbm_to_vmem [thread:$0]  %s601, 16, %s613, %s513
            %s616 = sadd.s32 %s581, 2
            %s617 = sld [smem:[#allocation5 + %s616]]
            %s618 = smul.addr %s617, 16
            %s619 = scalar_lea.hbm %s1, %s618
            %s620 = sadd.s32 2, %s580
            %s621 = sadd.s32 %s620, %s510
            %s622 = scalar_lea.vmem [#allocation2], %s621
            // Predicated region
            $region139: #{tpu_custom_call.1} parent=111 // pred_check
              _
            $region140: #{tpu_custom_call.1} parent=111 // pred_check_branch
              %624 = sbr.rel target = $region142
            $region141: #{tpu_custom_call.1} parent=111 // pred_region
              %625 = sst [smem:[#allocation12]] [#allocation57]
              %626 = sst [smem:[#allocation13]] [#allocation56]
            $region142: #{tpu_custom_call.1} parent=111 // pred_fallthru
              _
            %628 = shalt.err (0)
            %s630 = sshll.u32 %s622, 4
            %s631 = int_to_ptr.vmem [resolvable:$true] %s630
            %633 = dma.hbm_to_vmem [thread:$0]  %s619, 16, %s631, %s513
            %s634 = sadd.s32 %s581, 3
            %s635 = sld [smem:[#allocation5 + %s634]]
            %s636 = smul.addr %s635, 16
            %s637 = scalar_lea.hbm %s1, %s636
            %s638 = sadd.s32 3, %s580
            %s639 = sadd.s32 %s638, %s510
            %s640 = scalar_lea.vmem [#allocation2], %s639
            // Predicated region
            $region143: #{tpu_custom_call.1} parent=111 // pred_check
              _
            $region144: #{tpu_custom_call.1} parent=111 // pred_check_branch
              %642 = sbr.rel target = $region146
            $region145: #{tpu_custom_call.1} parent=111 // pred_region
              %643 = sst [smem:[#allocation12]] [#allocation59]
              %644 = sst [smem:[#allocation13]] [#allocation58]
            $region146: #{tpu_custom_call.1} parent=111 // pred_fallthru
              _
            %646 = shalt.err (0)
            %s648 = sshll.u32 %s640, 4
            %s649 = int_to_ptr.vmem [resolvable:$true] %s648
            %651 = dma.hbm_to_vmem [thread:$0]  %s637, 16, %s649, %s513
            %s652 = sadd.s32 %s503, 2
            %s653 = smul.u32 %s652, 4
            %s654 = sadd.s32 %s496, %s653
            %s655 = sld [smem:[#allocation5 + %s654]]
            %s656 = smul.addr %s655, 16
            %s657 = scalar_lea.hbm %s1, %s656
            %s658 = sadd.s32 %s653, %s510
            %s659 = scalar_lea.vmem [#allocation2], %s658
            // Predicated region
            $region147: #{tpu_custom_call.1} parent=111 // pred_check
              _
            $region148: #{tpu_custom_call.1} parent=111 // pred_check_branch
              %661 = sbr.rel target = $region150
            $region149: #{tpu_custom_call.1} parent=111 // pred_region
              %662 = sst [smem:[#allocation12]] [#allocation61]
              %663 = sst [smem:[#allocation13]] [#allocation60]
            $region150: #{tpu_custom_call.1} parent=111 // pred_fallthru
              _
            %665 = shalt.err (0)
            %s667 = sshll.u32 %s659, 4
            %s668 = int_to_ptr.vmem [resolvable:$true] %s667
            %670 = dma.hbm_to_vmem [thread:$0]  %s657, 16, %s668, %s513
            %s671 = sadd.s32 %s654, 1
            %s672 = sld [smem:[#allocation5 + %s671]]
            %s673 = smul.addr %s672, 16
            %s674 = scalar_lea.hbm %s1, %s673
            %s675 = sadd.s32 1, %s653
            %s676 = sadd.s32 %s675, %s510
            %s677 = scalar_lea.vmem [#allocation2], %s676
            // Predicated region
            $region151: #{tpu_custom_call.1} parent=111 // pred_check
              _
            $region152: #{tpu_custom_call.1} parent=111 // pred_check_branch
              %679 = sbr.rel target = $region154
            $region153: #{tpu_custom_call.1} parent=111 // pred_region
              %680 = sst [smem:[#allocation12]] [#allocation63]
              %681 = sst [smem:[#allocation13]] [#allocation62]
            $region154: #{tpu_custom_call.1} parent=111 // pred_fallthru
              _
            %683 = shalt.err (0)
            %s685 = sshll.u32 %s677, 4
            %s686 = int_to_ptr.vmem [resolvable:$true] %s685
            %688 = dma.hbm_to_vmem [thread:$0]  %s674, 16, %s686, %s513
            %s689 = sadd.s32 %s654, 2
            %s690 = sld [smem:[#allocation5 + %s689]]
            %s691 = smul.addr %s690, 16
            %s692 = scalar_lea.hbm %s1, %s691
            %s693 = sadd.s32 2, %s653
            %s694 = sadd.s32 %s693, %s510
            %s695 = scalar_lea.vmem [#allocation2], %s694
            // Predicated region
            $region155: #{tpu_custom_call.1} parent=111 // pred_check
              _
            $region156: #{tpu_custom_call.1} parent=111 // pred_check_branch
              %697 = sbr.rel target = $region158
            $region157: #{tpu_custom_call.1} parent=111 // pred_region
              %698 = sst [smem:[#allocation12]] [#allocation65]
              %699 = sst [smem:[#allocation13]] [#allocation64]
            $region158: #{tpu_custom_call.1} parent=111 // pred_fallthru
              _
            %701 = shalt.err (0)
            %s703 = sshll.u32 %s695, 4
            %s704 = int_to_ptr.vmem [resolvable:$true] %s703
            %706 = dma.hbm_to_vmem [thread:$0]  %s692, 16, %s704, %s513
            %s707 = sadd.s32 %s654, 3
            %s708 = sld [smem:[#allocation5 + %s707]]
            %s709 = smul.addr %s708, 16
            %s710 = scalar_lea.hbm %s1, %s709
            %s711 = sadd.s32 3, %s653
            %s712 = sadd.s32 %s711, %s510
            %s713 = scalar_lea.vmem [#allocation2], %s712
            // Predicated region
            $region159: #{tpu_custom_call.1} parent=111 // pred_check
              _
            $region160: #{tpu_custom_call.1} parent=111 // pred_check_branch
              %715 = sbr.rel target = $region162
            $region161: #{tpu_custom_call.1} parent=111 // pred_region
              %716 = sst [smem:[#allocation12]] [#allocation67]
              %717 = sst [smem:[#allocation13]] [#allocation66]
            $region162: #{tpu_custom_call.1} parent=111 // pred_fallthru
              _
            %719 = shalt.err (0)
            %s721 = sshll.u32 %s713, 4
            %s722 = int_to_ptr.vmem [resolvable:$true] %s721
            %724 = dma.hbm_to_vmem [thread:$0]  %s710, 16, %s722, %s513
            %s725 = sadd.s32 %s503, 3
            %s726 = smul.u32 %s725, 4
            %s727 = sadd.s32 %s496, %s726
            %s728 = sld [smem:[#allocation5 + %s727]]
            %s729 = smul.addr %s728, 16
            %s730 = scalar_lea.hbm %s1, %s729
            %s731 = sadd.s32 %s726, %s510
            %s732 = scalar_lea.vmem [#allocation2], %s731
            // Predicated region
            $region163: #{tpu_custom_call.1} parent=111 // pred_check
              _
            $region164: #{tpu_custom_call.1} parent=111 // pred_check_branch
              %734 = sbr.rel target = $region166
            $region165: #{tpu_custom_call.1} parent=111 // pred_region
              %735 = sst [smem:[#allocation12]] [#allocation69]
              %736 = sst [smem:[#allocation13]] [#allocation68]
            $region166: #{tpu_custom_call.1} parent=111 // pred_fallthru
              _
            %738 = shalt.err (0)
            %s740 = sshll.u32 %s732, 4
            %s741 = int_to_ptr.vmem [resolvable:$true] %s740
            %743 = dma.hbm_to_vmem [thread:$0]  %s730, 16, %s741, %s513
            %s744 = sadd.s32 %s727, 1
            %s745 = sld [smem:[#allocation5 + %s744]]
            %s746 = smul.addr %s745, 16
            %s747 = scalar_lea.hbm %s1, %s746
            %s748 = sadd.s32 1, %s726
            %s749 = sadd.s32 %s748, %s510
            %s750 = scalar_lea.vmem [#allocation2], %s749
            // Predicated region
            $region167: #{tpu_custom_call.1} parent=111 // pred_check
              _
            $region168: #{tpu_custom_call.1} parent=111 // pred_check_branch
              %752 = sbr.rel target = $region170
            $region169: #{tpu_custom_call.1} parent=111 // pred_region
              %753 = sst [smem:[#allocation12]] [#allocation71]
              %754 = sst [smem:[#allocation13]] [#allocation70]
            $region170: #{tpu_custom_call.1} parent=111 // pred_fallthru
              _
            %756 = shalt.err (0)
            %s758 = sshll.u32 %s750, 4
            %s759 = int_to_ptr.vmem [resolvable:$true] %s758
            %761 = dma.hbm_to_vmem [thread:$0]  %s747, 16, %s759, %s513
            %s762 = sadd.s32 %s727, 2
            %s763 = sld [smem:[#allocation5 + %s762]]
            %s764 = smul.addr %s763, 16
            %s765 = scalar_lea.hbm %s1, %s764
            %s766 = sadd.s32 2, %s726
            %s767 = sadd.s32 %s766, %s510
            %s768 = scalar_lea.vmem [#allocation2], %s767
            // Predicated region
            $region171: #{tpu_custom_call.1} parent=111 // pred_check
              _
            $region172: #{tpu_custom_call.1} parent=111 // pred_check_branch
              %770 = sbr.rel target = $region174
            $region173: #{tpu_custom_call.1} parent=111 // pred_region
              %771 = sst [smem:[#allocation12]] [#allocation73]
              %772 = sst [smem:[#allocation13]] [#allocation72]
            $region174: #{tpu_custom_call.1} parent=111 // pred_fallthru
              _
            %774 = shalt.err (0)
            %s776 = sshll.u32 %s768, 4
            %s777 = int_to_ptr.vmem [resolvable:$true] %s776
            %779 = dma.hbm_to_vmem [thread:$0]  %s765, 16, %s777, %s513
            %s780 = sadd.s32 %s727, 3
            %s781 = sld [smem:[#allocation5 + %s780]]
            %s782 = smul.addr %s781, 16
            %s783 = scalar_lea.hbm %s1, %s782
            %s784 = sadd.s32 3, %s726
            %s785 = sadd.s32 %s784, %s510
            %s786 = scalar_lea.vmem [#allocation2], %s785
            // Predicated region
            $region175: #{tpu_custom_call.1} parent=111 // pred_check
              _
            $region176: #{tpu_custom_call.1} parent=111 // pred_check_branch
              %788 = sbr.rel target = $region178
            $region177: #{tpu_custom_call.1} parent=111 // pred_region
              %789 = sst [smem:[#allocation12]] [#allocation75]
              %790 = sst [smem:[#allocation13]] [#allocation74]
            $region178: #{tpu_custom_call.1} parent=111 // pred_fallthru
              _
            %792 = shalt.err (0)
            %s794 = sshll.u32 %s786, 4
            %s795 = int_to_ptr.vmem [resolvable:$true] %s794
            %797 = dma.hbm_to_vmem [thread:$0]  %s783, 16, %s795, %s513
          $region112: #{tpu_custom_call.1} parent=106 // loop_footer
            %s502 = sadd.s32 1, %s498
          $region113: #{tpu_custom_call.1} parent=106 // loop_footer_branch
            %497 = sbr.rel target = $region109
          $region114: #{tpu_custom_call.1} parent=106 // loop_exit
            _
        $region107: #{tpu_custom_call.1} parent=23 // pred_fallthru
          _
        loop: start=0, step=1, limit=4
        $region179: #{tpu_custom_call.1} parent=23 // loop_pre_header
          _
        $region180: #{tpu_custom_call.1} parent=23 // loop_header
          %s799 = sphi 0, %s803
          %p800 = scmp.ge.s32.totalorder %s799, 4
        $region181: #{tpu_custom_call.1} parent=23 // loop_header_branch
          %802 = sbr.rel (%p800) target = $region185
        $region182: #{tpu_custom_call.1} parent=23 // loop_body
          %s804 = scalar_lea.sflag [#allocation3], %s180
          %s805 = smul.u32 1, 1
          %s806 = sshll.u32 %s805, 4
          %807 = dma.done %s804, %s806
          %s808 = sshll.u32 %s805, 4
          %809 = dma.done %s804, %s808
          %s810 = sshll.u32 %s805, 4
          %811 = dma.done %s804, %s810
          %s812 = sshll.u32 %s805, 4
          %813 = dma.done %s804, %s812
          %s814 = sshll.u32 %s805, 4
          %815 = dma.done %s804, %s814
          %s816 = sshll.u32 %s805, 4
          %817 = dma.done %s804, %s816
          %s818 = sshll.u32 %s805, 4
          %819 = dma.done %s804, %s818
          %s820 = sshll.u32 %s805, 4
          %821 = dma.done %s804, %s820
        $region183: #{tpu_custom_call.1} parent=23 // loop_footer
          %s803 = sadd.s32 1, %s799
        $region184: #{tpu_custom_call.1} parent=23 // loop_footer_branch
          %798 = sbr.rel target = $region180
        $region185: #{tpu_custom_call.1} parent=23 // loop_exit
          _
        %s822 = smul.u32 %s180, 32
        %s823 = scalar_lea.vmem [#allocation2], %s822
        %v824 = vld [vmem:[%s823] sm:$0xf]
        %v825 = vld [vmem:[%s823 + $0x4] sm:$0xf]
        %v826 = vld [vmem:[%s823 + $0x8] sm:$0xf]
        %v827 = vld [vmem:[%s823 + $0xc] sm:$0xf]
        %v828 = vld [vmem:[%s823 + $0x10] sm:$0xf]
        %v829 = vld [vmem:[%s823 + $0x14] sm:$0xf]
        %v830 = vld [vmem:[%s823 + $0x18] sm:$0xf]
        %v831 = vld [vmem:[%s823 + $0x1c] sm:$0xf]
        %v832 = vmul.f32 %v824, 11.313708
        %v833 = vmul.f32 %v825, 11.313708
        %v834 = vmul.f32 %v826, 11.313708
        %v835 = vmul.f32 %v827, 11.313708
        %v836 = vmul.f32 %v828, 11.313708
        %v837 = vmul.f32 %v829, 11.313708
        %v838 = vmul.f32 %v830, 11.313708
        %v839 = vmul.f32 %v831, 11.313708
        %v840 = vld [vmem:[%s144] sm:$0x1]
        %v841 = vld [vmem:[%s144 + $0x1] sm:$0x1]
        %v842 = vld [vmem:[%s144 + $0x2] sm:$0x1]
        %v843 = vld [vmem:[%s144 + $0x3] sm:$0x1]
        %v844 = vld [vmem:[%s144 + $0x4] sm:$0x1]
        %v845 = vld [vmem:[%s144 + $0x5] sm:$0x1]
        %v846 = vld [vmem:[%s144 + $0x6] sm:$0x1]
        %v847 = vld [vmem:[%s144 + $0x7] sm:$0x1]
        %v856 = vlaneseq
        %v857 = vshrl.u32 %v856, 7
        %v858 = vsub.s32 0, %v857
        %v859 = vrot.slane %v840, %v858
        %v860 = vlaneseq
        %v861 = vshrl.u32 %v860, 7
        %v862 = vsub.s32 0, %v861
        %v863 = vrot.slane %v841, %v862
        %v864 = vlaneseq
        %v865 = vshrl.u32 %v864, 7
        %v866 = vsub.s32 0, %v865
        %v867 = vrot.slane %v842, %v866
        %v868 = vlaneseq
        %v869 = vshrl.u32 %v868, 7
        %v870 = vsub.s32 0, %v869
        %v871 = vrot.slane %v843, %v870
        %v872 = vlaneseq
        %v873 = vshrl.u32 %v872, 7
        %v874 = vsub.s32 0, %v873
        %v875 = vrot.slane %v844, %v874
        %v876 = vlaneseq
        %v877 = vshrl.u32 %v876, 7
        %v878 = vsub.s32 0, %v877
        %v879 = vrot.slane %v845, %v878
        %v880 = vlaneseq
        %v881 = vshrl.u32 %v880, 7
        %v882 = vsub.s32 0, %v881
        %v883 = vrot.slane %v846, %v882
        %v884 = vlaneseq
        %v885 = vshrl.u32 %v884, 7
        %v886 = vsub.s32 0, %v885
        %v887 = vrot.slane %v847, %v886
        %v896 = vadd.f32 %v832, %v859
        %v897 = vadd.f32 %v833, %v863
        %v898 = vadd.f32 %v834, %v867
        %v899 = vadd.f32 %v835, %v871
        %v900 = vadd.f32 %v836, %v875
        %v901 = vadd.f32 %v837, %v879
        %v902 = vadd.f32 %v838, %v883
        %v903 = vadd.f32 %v839, %v887
        %904 = vst [vmem:[%s162] sm:$0xf] %v896
        %905 = vst [vmem:[%s162 + $0x4] sm:$0xf] %v897
        %906 = vst [vmem:[%s162 + $0x8] sm:$0xf] %v898
        %907 = vst [vmem:[%s162 + $0xc] sm:$0xf] %v899
        %908 = vst [vmem:[%s162 + $0x10] sm:$0xf] %v900
        %909 = vst [vmem:[%s162 + $0x14] sm:$0xf] %v901
        %910 = vst [vmem:[%s162 + $0x18] sm:$0xf] %v902
        %911 = vst [vmem:[%s162 + $0x1c] sm:$0xf] %v903
        %s912 = sand.u32 %s78, 1
        %s913 = scalar_lea.sflag [#allocation8], %s912
        %s914 = sand.u32 %s78, 1
        %s915 = smul.addr %s914, 32
        %s916 = scalar_lea.vmem [#allocation9], %s915
        // Predicated region
        $region186: #{tpu_custom_call.1} parent=23 // pred_check
          %p917 = pneg %p88
        $region187: #{tpu_custom_call.1} parent=23 // pred_check_branch
          %919 = sbr.rel (%p917) target = $region189
        $region188: #{tpu_custom_call.1} parent=23 // pred_region
          %s920 = smul.u32 %s28, 2
          %s921 = sadd.s32 %s920, %s29
          %s922 = smul.u32 8, %s921
          %s924 = ssub.s32 512, 512
          %925 = vsyncadd %s913, %s924
          %s926 = smul.addr %s922, 64
          %s927 = scalar_lea.hbm %s3, %s926
          %s928 = sshll.u32 %s916, 4
          %s929 = int_to_ptr.vmem [resolvable:$true] %s928
          %934 = dma.vmem_to_hbm [thread:$0]  %s929, 512, %s927, %s913, 64, 64, 4
        $region189: #{tpu_custom_call.1} parent=23 // pred_fallthru
          _
      $region24: #{tpu_custom_call.1} parent=5 // pred_fallthru
        _
      %p935 = scmp.le.s32.totalorder 2, %s19
      // Predicated region
      $region190: #{tpu_custom_call.1} parent=5 // pred_check
        %p936 = pneg %p935
      $region191: #{tpu_custom_call.1} parent=5 // pred_check_branch
        %938 = sbr.rel (%p936) target = $region193
      $region192: #{tpu_custom_call.1} parent=5 // pred_region
        %s939 = ssub.s32 %s19, 2
        // Predicated region
        $region194: #{tpu_custom_call.1} parent=192 // pred_check
          %p940 = pneg %p94
        $region195: #{tpu_custom_call.1} parent=192 // pred_check_branch
          %942 = sbr.rel (%p940) target = $region197
        $region196: #{tpu_custom_call.1} parent=192 // pred_region
          %s943 = sand.u32 %s79, 1
          %s944 = scalar_lea.sflag [#allocation8], %s943
          %s945 = sand.u32 %s79, 1
          %s946 = smul.addr %s945, 32
          %s947 = scalar_lea.vmem [#allocation9], %s946
          %948 = dma.done %s944, 512
        $region197: #{tpu_custom_call.1} parent=192 // pred_fallthru
          _
      $region193: #{tpu_custom_call.1} parent=5 // pred_fallthru
        _
    $region6: #{tpu_custom_call.1} parent=1 // loop_footer
      %s23 = sadd.s32 1, %s19
    $region7: #{tpu_custom_call.1} parent=1 // loop_footer_branch
      %18 = sbr.rel target = $region3
    $region8: #{tpu_custom_call.1} parent=1 // loop_exit
      _
    %949 = vsyncpa [#allocation7], 1
    %s950 = scalar_lea.sflag [#allocation7], 1
    %951 = vsyncpa %s950, 1
    %952 = vsyncpa [#allocation8], 1
    %s953 = scalar_lea.sflag [#allocation8], 1
    %954 = vsyncpa %s953, 1
  %955 = vsyncmov [#allocation3]
  %s956 = vpop.sfrf %955
  %p957 = scmp.eq.s32.totalorder %s956, 0
  %p958 = pneg %p957
  %960 = shalt.err (%p958)
  %s961 = scalar_lea.sflag [#allocation3], 1
  %962 = vsyncmov %s961
  %s963 = vpop.sfrf %962
  %p964 = scmp.eq.s32.totalorder %s963, 0
  %p965 = pneg %p964
  %967 = shalt.err (%p965)

</llo_original>
